<compile_context>
chip_gen: v6e
topology: v6e:2x2x1
jax: 0.10.0
libtpu: 0.0.40
codegen_flags: <defaults>
</compile_context>

<pallas_src>
import math

import jax
import jax.numpy as jnp
import numpy as np
from jax import lax
from jax.experimental import pallas as pl
from jax.experimental.pallas import tpu as pltpu

# ---------------- model hyper-parameters (small, consistent with the module) ----------------
N_BATCH = 2
SEQ = 8
EMBED = 32
HEADS = 4
HEAD_DIM = EMBED // HEADS
FWD_EXP = 4
HIDDEN = int(FWD_EXP * EMBED)          # 128 == one full lane width
LN_EPS = 1e-5

W_ROWS = 3 * EMBED + HIDDEN            # wqkv(32) + wo(32) + w1(32) + w2(128) = 224


def _layernorm(x, gamma, beta):
    # LayerNorm over the last axis, biased variance (PyTorch semantics).
    mean = jnp.mean(x, axis=-1, keepdims=True)
    var = jnp.mean((x - mean) ** 2, axis=-1, keepdims=True)
    inv = lax.rsqrt(var + LN_EPS)
    return (x - mean) * inv * gamma + beta


def _gelu_exact(x):
    # nn.GELU default: 0.5 * x * (1 + erf(x / sqrt(2)))
    return 0.5 * x * (1.0 + lax.erf(x * (1.0 / math.sqrt(2.0))))


def transformer_block_kernel(x_ref, w_ref, vec_ref, o_ref):
    x = x_ref[...]                                                   # (N*S, E)
    W = w_ref[...]                                                   # (224, 128) weight slab
    V = vec_ref[...]                                                 # (8, 128)  bias/LN slab

    # --- fused Q/K/V projection (softmax scale folded into Q weight/bias at trace time) ---
    # wqkv is lane-padded to 128; padding columns are zero so the extra lanes stay zero.
    qkv = jnp.dot(x, W[0:EMBED, :], preferred_element_type=jnp.float32) + V[0:1, :]  # (16,128)
    q = qkv[:, 0 * EMBED:1 * EMBED]
    k = qkv[:, 1 * EMBED:2 * EMBED]
    v = qkv[:, 2 * EMBED:3 * EMBED]

    # --- head-batched attention: heads stacked on the leading (batch) dim ---
    def split_heads(t):  # (N*S, E) -> (HEADS*N, S, D); lane slice + leading-dim stack only
        return jnp.concatenate(
            [t[:, h * HEAD_DIM:(h + 1) * HEAD_DIM].reshape(N_BATCH, SEQ, HEAD_DIM)
             for h in range(HEADS)],
            axis=0)

    qh, kh, vh = split_heads(q), split_heads(k), split_heads(v)      # (H*N, S, D)

    energy = jnp.einsum("bqd,bkd->bqk", qh, kh,
                        preferred_element_type=jnp.float32)          # (H*N, S, S)
    m = jnp.max(energy, axis=-1, keepdims=True)
    p = jnp.exp(energy - m)
    denom = jnp.sum(p, axis=-1, keepdims=True)
    inv = pl.reciprocal(denom, approx=True)                          # EUP slot
    inv = inv * (2.0 - denom * inv)                                  # Newton step -> f32 accuracy
    ctx = jnp.einsum("bqk,bkd->bqd", p * inv, vh,
                     preferred_element_type=jnp.float32)             # (H*N, S, D)

    # merge heads back along lanes -> (N*S, E), head order h0..h3
    ctx2d = jnp.concatenate(
        [ctx[h * N_BATCH:(h + 1) * N_BATCH].reshape(N_BATCH * SEQ, HEAD_DIM)
         for h in range(HEADS)],
        axis=-1)

    # --- single output projection (wo lane-padded; extra result lanes are zero, sliced off) ---
    attn_full = jnp.dot(ctx2d, W[EMBED:2 * EMBED, :],
                        preferred_element_type=jnp.float32)          # (16, 128)
    attn = attn_full[:, 0:EMBED] + V[2:3, 0:EMBED]                   # + bo

    g1, be1 = V[3:4, 0:EMBED], V[4:5, 0:EMBED]
    b2, g2, be2 = V[5:6, 0:EMBED], V[6:7, 0:EMBED], V[7:8, 0:EMBED]

    # --- residual + LayerNorm1 (dropout = identity) ---
    x1 = _layernorm(attn + x, g1, be1)

    # --- feed-forward ---
    hid = jnp.dot(x1, W[2 * EMBED:3 * EMBED, :],
                  preferred_element_type=jnp.float32) + V[1:2, :]    # (16, 128)
    hid = _gelu_exact(hid)
    ff_full = jnp.dot(hid, W[3 * EMBED:3 * EMBED + HIDDEN, :],
                      preferred_element_type=jnp.float32)            # (16, 128)
    ff = ff_full[:, 0:EMBED] + b2

    # --- residual + LayerNorm2 (dropout = identity) ---
    out = _layernorm(ff + x1, g2, be2)
    o_ref[...] = out.astype(o_ref.dtype)


@jax.jit
def transformer_block(x, params):
    N, S, E = x.shape
    scale = 1.0 / math.sqrt(E)

    def pad_cols(a, width=HIDDEN):
        return jnp.pad(a, ((0, 0), (0, width - a.shape[1])))

    # Trace-time weight prep (fused at jit level, not inside the kernel):
    #   * fold the 1/sqrt(embed_size) softmax scale into the Q projection
    #   * fuse Q/K/V weights and biases into single operands
    #   * pack ALL weights into one (224, 128) slab and ALL vectors into one (8, 128) slab
    wqkv = jnp.concatenate([params["wq"] * scale, params["wk"], params["wv"]], axis=1)  # (32,96)
    wslab = jnp.concatenate([
        pad_cols(wqkv),            # rows   0: 32  -> wqkv (lane-padded)
        pad_cols(params["wo"]),    # rows  32: 64  -> wo   (lane-padded)
        params["w1"],              # rows  64: 96  -> w1   (32,128)
        pad_cols(params["w2"]),    # rows  96:224  -> w2   (lane-padded)
    ], axis=0)                     # (224, 128)

    bqkv = jnp.concatenate([params["bq"] * scale, params["bk"], params["bv"]], axis=1)  # (1,96)
    vecs = jnp.concatenate([
        pad_cols(bqkv),            # row 0: bqkv
        params["b1"],              # row 1: b1 (1,128)
        pad_cols(params["bo"]),    # row 2: bo
        pad_cols(params["g1"]),    # row 3: gamma1
        pad_cols(params["be1"]),   # row 4: beta1
        pad_cols(params["b2"]),    # row 5: b2
        pad_cols(params["g2"]),    # row 6: gamma2
        pad_cols(params["be2"]),   # row 7: beta2
    ], axis=0)                     # (8, 128)

    x2d = x.reshape(N * S, E)                                        # flatten batch into M-dim
    vmem = pl.BlockSpec(memory_space=pltpu.MemorySpace.VMEM)
    out2d = pl.pallas_call(
        transformer_block_kernel,
        out_shape=jax.ShapeDtypeStruct((N * S, E), x.dtype),
        in_specs=[vmem, vmem, vmem],
        out_specs=vmem,
    )(x2d, wslab, vecs)
    return out2d.reshape(N, S, E)


# ---------------- deterministic parameter init (PyTorch-Linear-style uniform) ----------------
def init_params(key):
    def linear(k, fan_in, fan_out):
        k1, k2 = jax.random.split(k)
        bound = 1.0 / math.sqrt(fan_in)
        # stored as (in, out) so the kernel does x @ W + b
        w = jax.random.uniform(k1, (fan_in, fan_out), jnp.float32, -bound, bound)
        b = jax.random.uniform(k2, (1, fan_out), jnp.float32, -bound, bound)
        return w, b

    ks = jax.random.split(key, 6)
    wq, bq = linear(ks[0], EMBED, EMBED)
    wk, bk = linear(ks[1], EMBED, EMBED)
    wv, bv = linear(ks[2], EMBED, EMBED)
    wo, bo = linear(ks[3], EMBED, EMBED)
    w1, b1 = linear(ks[4], EMBED, HIDDEN)
    w2, b2 = linear(ks[5], HIDDEN, EMBED)
    return dict(
        wq=wq, bq=bq, wk=wk, bk=bk, wv=wv, bv=bv, wo=wo, bo=bo,
        g1=jnp.ones((1, EMBED), jnp.float32), be1=jnp.zeros((1, EMBED), jnp.float32),
        w1=w1, b1=b1, w2=w2, b2=b2,
        g2=jnp.ones((1, EMBED), jnp.float32), be2=jnp.zeros((1, EMBED), jnp.float32),
    )


# ---------------- pure-JAX reference (mirrors the PyTorch forward) ----------------
def reference(x, p):
    q = x @ p["wq"] + p["bq"]
    k = x @ p["wk"] + p["bk"]
    v = x @ p["wv"] + p["bv"]
    N, S, E = x.shape
    qh = q.reshape(N, S, HEADS, HEAD_DIM)
    kh = k.reshape(N, S, HEADS, HEAD_DIM)
    vh = v.reshape(N, S, HEADS, HEAD_DIM)
    energy = jnp.einsum("nqhd,nkhd->nhqk", qh, kh)
    att = jax.nn.softmax(energy / math.sqrt(EMBED), axis=3)
    attn = jnp.einsum("nhql,nlhd->nqhd", att, vh).reshape(N, S, E)
    attn = attn @ p["wo"] + p["bo"]

    def ln(z, g, b):
        mu = jnp.mean(z, axis=-1, keepdims=True)
        var = jnp.mean((z - mu) ** 2, axis=-1, keepdims=True)
        return (z - mu) / jnp.sqrt(var + LN_EPS) * g + b

    x1 = ln(attn + x, p["g1"], p["be1"])
    hid = jax.nn.gelu(x1 @ p["w1"] + p["b1"], approximate=False)
    ff = hid @ p["w2"] + p["b2"]
    return ln(ff + x1, p["g2"], p["be2"])


if __name__ == "__main__":
    key = jax.random.PRNGKey(0)
    kx, kp = jax.random.split(key)
    x = jax.random.normal(kx, (N_BATCH, SEQ, EMBED), jnp.float32)
    params = init_params(kp)

    out = transformer_block(x, params)
    out = jax.block_until_ready(out)

    ref = reference(x, params)
    np.testing.assert_allclose(np.asarray(out), np.asarray(ref), rtol=1e-3, atol=1e-3)
    print("KERNEL_OK")
</pallas_src>

<mosaic_0001>
module attributes {stable_mosaic.version = 11 : i64} {
  func.func @transformer_block_kernel(%arg0: memref<16x32xf32, #tpu.memory_space<vmem>>, %arg1: memref<224x128xf32, #tpu.memory_space<vmem>>, %arg2: memref<8x128xf32, #tpu.memory_space<vmem>>, %arg3: memref<16x32xf32, #tpu.memory_space<vmem>>) attributes {dimension_semantics = [], scalar_prefetch = 0 : i64, scratch_operands = 0 : i64, tpu.core_type = #tpu.core_type<tc>} {
    %c0 = arith.constant 0 : index
    %c0_0 = arith.constant 0 : index
    %0 = vector.load %arg0[%c0, %c0_0] : memref<16x32xf32, #tpu.memory_space<vmem>>, vector<16x32xf32>
    %c0_1 = arith.constant 0 : index
    %c0_2 = arith.constant 0 : index
    %1 = vector.load %arg1[%c0_1, %c0_2] : memref<224x128xf32, #tpu.memory_space<vmem>>, vector<224x128xf32>
    %c0_3 = arith.constant 0 : index
    %c0_4 = arith.constant 0 : index
    %2 = vector.load %arg2[%c0_3, %c0_4] : memref<8x128xf32, #tpu.memory_space<vmem>>, vector<8x128xf32>
    %3 = vector.extract_strided_slice %1 {offsets = [0, 0], sizes = [32, 128], strides = [1, 1]} : vector<224x128xf32> to vector<32x128xf32>
    %cst = arith.constant dense<0.000000e+00> : vector<16x128xf32>
    %4 = tpu.matmul %0, %3, %cst {dimension_numbers = #tpu.dot_dimension_numbers<[1], [0], [0], [1], [0, 0, 1, 1], [], []>} : vector<16x32xf32>, vector<32x128xf32>, vector<16x128xf32> -> vector<16x128xf32>
    %5 = vector.extract_strided_slice %2 {offsets = [0, 0], sizes = [1, 128], strides = [1, 1]} : vector<8x128xf32> to vector<1x128xf32>
    %6 = vector.broadcast %5 : vector<1x128xf32> to vector<16x128xf32>
    %7 = arith.addf %4, %6 : vector<16x128xf32>
    %8 = vector.extract_strided_slice %7 {offsets = [0, 0], sizes = [16, 32], strides = [1, 1]} : vector<16x128xf32> to vector<16x32xf32>
    %9 = vector.extract_strided_slice %7 {offsets = [0, 32], sizes = [16, 32], strides = [1, 1]} : vector<16x128xf32> to vector<16x32xf32>
    %10 = vector.extract_strided_slice %7 {offsets = [0, 64], sizes = [16, 32], strides = [1, 1]} : vector<16x128xf32> to vector<16x32xf32>
    %11 = vector.extract_strided_slice %8 {offsets = [0, 0], sizes = [16, 8], strides = [1, 1]} : vector<16x32xf32> to vector<16x8xf32>
    %12 = vector.shape_cast %11 : vector<16x8xf32> to vector<2x8x8xf32>
    %13 = vector.extract_strided_slice %8 {offsets = [0, 8], sizes = [16, 8], strides = [1, 1]} : vector<16x32xf32> to vector<16x8xf32>
    %14 = vector.shape_cast %13 : vector<16x8xf32> to vector<2x8x8xf32>
    %15 = vector.extract_strided_slice %8 {offsets = [0, 16], sizes = [16, 8], strides = [1, 1]} : vector<16x32xf32> to vector<16x8xf32>
    %16 = vector.shape_cast %15 : vector<16x8xf32> to vector<2x8x8xf32>
    %17 = vector.extract_strided_slice %8 {offsets = [0, 24], sizes = [16, 8], strides = [1, 1]} : vector<16x32xf32> to vector<16x8xf32>
    %18 = vector.shape_cast %17 : vector<16x8xf32> to vector<2x8x8xf32>
    %19 = tpu.concatenate %12, %14, %16, %18 in 0 : vector<2x8x8xf32>, vector<2x8x8xf32>, vector<2x8x8xf32>, vector<2x8x8xf32> -> vector<8x8x8xf32>
    %20 = vector.extract_strided_slice %9 {offsets = [0, 0], sizes = [16, 8], strides = [1, 1]} : vector<16x32xf32> to vector<16x8xf32>
    %21 = vector.shape_cast %20 : vector<16x8xf32> to vector<2x8x8xf32>
    %22 = vector.extract_strided_slice %9 {offsets = [0, 8], sizes = [16, 8], strides = [1, 1]} : vector<16x32xf32> to vector<16x8xf32>
    %23 = vector.shape_cast %22 : vector<16x8xf32> to vector<2x8x8xf32>
    %24 = vector.extract_strided_slice %9 {offsets = [0, 16], sizes = [16, 8], strides = [1, 1]} : vector<16x32xf32> to vector<16x8xf32>
    %25 = vector.shape_cast %24 : vector<16x8xf32> to vector<2x8x8xf32>
    %26 = vector.extract_strided_slice %9 {offsets = [0, 24], sizes = [16, 8], strides = [1, 1]} : vector<16x32xf32> to vector<16x8xf32>
    %27 = vector.shape_cast %26 : vector<16x8xf32> to vector<2x8x8xf32>
    %28 = tpu.concatenate %21, %23, %25, %27 in 0 : vector<2x8x8xf32>, vector<2x8x8xf32>, vector<2x8x8xf32>, vector<2x8x8xf32> -> vector<8x8x8xf32>
    %29 = vector.extract_strided_slice %10 {offsets = [0, 0], sizes = [16, 8], strides = [1, 1]} : vector<16x32xf32> to vector<16x8xf32>
    %30 = vector.shape_cast %29 : vector<16x8xf32> to vector<2x8x8xf32>
    %31 = vector.extract_strided_slice %10 {offsets = [0, 8], sizes = [16, 8], strides = [1, 1]} : vector<16x32xf32> to vector<16x8xf32>
    %32 = vector.shape_cast %31 : vector<16x8xf32> to vector<2x8x8xf32>
    %33 = vector.extract_strided_slice %10 {offsets = [0, 16], sizes = [16, 8], strides = [1, 1]} : vector<16x32xf32> to vector<16x8xf32>
    %34 = vector.shape_cast %33 : vector<16x8xf32> to vector<2x8x8xf32>
    %35 = vector.extract_strided_slice %10 {offsets = [0, 24], sizes = [16, 8], strides = [1, 1]} : vector<16x32xf32> to vector<16x8xf32>
    %36 = vector.shape_cast %35 : vector<16x8xf32> to vector<2x8x8xf32>
    %37 = tpu.concatenate %30, %32, %34, %36 in 0 : vector<2x8x8xf32>, vector<2x8x8xf32>, vector<2x8x8xf32>, vector<2x8x8xf32> -> vector<8x8x8xf32>
    "tpu.trace_start"() <{level = 10 : i32, message = "bqd,bkd->bqk"}> : () -> ()
    %cst_5 = arith.constant dense<0.000000e+00> : vector<8x8x8xf32>
    %38 = tpu.matmul %19, %28, %cst_5 {dimension_numbers = #tpu.dot_dimension_numbers<[2], [2], [1], [1], [0, 0, 0, 1, 1, 1], [0], [0]>} : vector<8x8x8xf32>, vector<8x8x8xf32>, vector<8x8x8xf32> -> vector<8x8x8xf32>
    "tpu.trace_stop"() : () -> ()
    %cst_6 = arith.constant dense<0xFF800000> : vector<8x8xf32>
    %39 = vector.multi_reduction <maximumf>, %38, %cst_6 [2] : vector<8x8x8xf32> to vector<8x8xf32>
    %40 = vector.shape_cast %39 : vector<8x8xf32> to vector<8x8x1xf32>
    %41 = vector.broadcast %40 : vector<8x8x1xf32> to vector<8x8x8xf32>
    %42 = arith.subf %38, %41 : vector<8x8x8xf32>
    %43 = math.exp %42 : vector<8x8x8xf32>
    %cst_7 = arith.constant dense<0.000000e+00> : vector<8x8xf32>
    %44 = vector.multi_reduction <add>, %43, %cst_7 [2] : vector<8x8x8xf32> to vector<8x8xf32>
    %45 = vector.shape_cast %44 : vector<8x8xf32> to vector<8x8x1xf32>
    %46 = tpu.reciprocal %45 {approx = true} : vector<8x8x1xf32> -> vector<8x8x1xf32>
    %47 = arith.mulf %45, %46 : vector<8x8x1xf32>
    %cst_8 = arith.constant 2.000000e+00 : f32
    %48 = vector.broadcast %cst_8 : f32 to vector<8x8x1xf32>
    %49 = arith.subf %48, %47 : vector<8x8x1xf32>
    %50 = arith.mulf %46, %49 : vector<8x8x1xf32>
    %51 = vector.broadcast %50 : vector<8x8x1xf32> to vector<8x8x8xf32>
    %52 = arith.mulf %43, %51 : vector<8x8x8xf32>
    "tpu.trace_start"() <{level = 10 : i32, message = "bqk,bkd->bqd"}> : () -> ()
    %cst_9 = arith.constant dense<0.000000e+00> : vector<8x8x8xf32>
    %53 = tpu.matmul %52, %37, %cst_9 {dimension_numbers = #tpu.dot_dimension_numbers<[2], [1], [1], [2], [0, 0, 0, 1, 1, 2], [0], [0]>} : vector<8x8x8xf32>, vector<8x8x8xf32>, vector<8x8x8xf32> -> vector<8x8x8xf32>
    "tpu.trace_stop"() : () -> ()
    %54 = vector.extract_strided_slice %53 {offsets = [0, 0, 0], sizes = [2, 8, 8], strides = [1, 1, 1]} : vector<8x8x8xf32> to vector<2x8x8xf32>
    %55 = vector.shape_cast %54 : vector<2x8x8xf32> to vector<16x8xf32>
    %56 = vector.extract_strided_slice %53 {offsets = [2, 0, 0], sizes = [2, 8, 8], strides = [1, 1, 1]} : vector<8x8x8xf32> to vector<2x8x8xf32>
    %57 = vector.shape_cast %56 : vector<2x8x8xf32> to vector<16x8xf32>
    %58 = vector.extract_strided_slice %53 {offsets = [4, 0, 0], sizes = [2, 8, 8], strides = [1, 1, 1]} : vector<8x8x8xf32> to vector<2x8x8xf32>
    %59 = vector.shape_cast %58 : vector<2x8x8xf32> to vector<16x8xf32>
    %60 = vector.extract_strided_slice %53 {offsets = [6, 0, 0], sizes = [2, 8, 8], strides = [1, 1, 1]} : vector<8x8x8xf32> to vector<2x8x8xf32>
    %61 = vector.shape_cast %60 : vector<2x8x8xf32> to vector<16x8xf32>
    %62 = tpu.concatenate %55, %57, %59, %61 in 1 : vector<16x8xf32>, vector<16x8xf32>, vector<16x8xf32>, vector<16x8xf32> -> vector<16x32xf32>
    %63 = vector.extract_strided_slice %1 {offsets = [32, 0], sizes = [32, 128], strides = [1, 1]} : vector<224x128xf32> to vector<32x128xf32>
    %cst_10 = arith.constant dense<0.000000e+00> : vector<16x128xf32>
    %64 = tpu.matmul %62, %63, %cst_10 {dimension_numbers = #tpu.dot_dimension_numbers<[1], [0], [0], [1], [0, 0, 1, 1], [], []>} : vector<16x32xf32>, vector<32x128xf32>, vector<16x128xf32> -> vector<16x128xf32>
    %65 = vector.extract_strided_slice %64 {offsets = [0, 0], sizes = [16, 32], strides = [1, 1]} : vector<16x128xf32> to vector<16x32xf32>
    %66 = vector.extract_strided_slice %2 {offsets = [2, 0], sizes = [1, 32], strides = [1, 1]} : vector<8x128xf32> to vector<1x32xf32>
    %67 = vector.broadcast %66 : vector<1x32xf32> to vector<16x32xf32>
    %68 = arith.addf %65, %67 : vector<16x32xf32>
    %69 = vector.extract_strided_slice %2 {offsets = [3, 0], sizes = [1, 32], strides = [1, 1]} : vector<8x128xf32> to vector<1x32xf32>
    %70 = vector.extract_strided_slice %2 {offsets = [4, 0], sizes = [1, 32], strides = [1, 1]} : vector<8x128xf32> to vector<1x32xf32>
    %71 = vector.extract_strided_slice %2 {offsets = [5, 0], sizes = [1, 32], strides = [1, 1]} : vector<8x128xf32> to vector<1x32xf32>
    %72 = vector.extract_strided_slice %2 {offsets = [6, 0], sizes = [1, 32], strides = [1, 1]} : vector<8x128xf32> to vector<1x32xf32>
    %73 = vector.extract_strided_slice %2 {offsets = [7, 0], sizes = [1, 32], strides = [1, 1]} : vector<8x128xf32> to vector<1x32xf32>
    %74 = arith.addf %68, %0 : vector<16x32xf32>
    %cst_11 = arith.constant dense<0.000000e+00> : vector<16xf32>
    %75 = vector.multi_reduction <add>, %74, %cst_11 [1] : vector<16x32xf32> to vector<16xf32>
    %76 = vector.shape_cast %75 : vector<16xf32> to vector<16x1xf32>
    %cst_12 = arith.constant 3.200000e+01 : f32
    %77 = vector.broadcast %cst_12 : f32 to vector<16x1xf32>
    %78 = arith.divf %76, %77 : vector<16x1xf32>
    %79 = vector.broadcast %78 : vector<16x1xf32> to vector<16x32xf32>
    %80 = arith.subf %74, %79 : vector<16x32xf32>
    %81 = arith.mulf %80, %80 : vector<16x32xf32>
    %cst_13 = arith.constant dense<0.000000e+00> : vector<16xf32>
    %82 = vector.multi_reduction <add>, %81, %cst_13 [1] : vector<16x32xf32> to vector<16xf32>
    %83 = vector.shape_cast %82 : vector<16xf32> to vector<16x1xf32>
    %cst_14 = arith.constant 3.200000e+01 : f32
    %84 = vector.broadcast %cst_14 : f32 to vector<16x1xf32>
    %85 = arith.divf %83, %84 : vector<16x1xf32>
    %cst_15 = arith.constant 9.99999974E-6 : f32
    %86 = vector.broadcast %cst_15 : f32 to vector<16x1xf32>
    %87 = arith.addf %85, %86 : vector<16x1xf32>
    %88 = math.rsqrt %87 : vector<16x1xf32>
    %89 = vector.broadcast %78 : vector<16x1xf32> to vector<16x32xf32>
    %90 = arith.subf %74, %89 : vector<16x32xf32>
    %91 = vector.broadcast %88 : vector<16x1xf32> to vector<16x32xf32>
    %92 = arith.mulf %90, %91 : vector<16x32xf32>
    %93 = vector.broadcast %69 : vector<1x32xf32> to vector<16x32xf32>
    %94 = arith.mulf %92, %93 : vector<16x32xf32>
    %95 = vector.broadcast %70 : vector<1x32xf32> to vector<16x32xf32>
    %96 = arith.addf %94, %95 : vector<16x32xf32>
    %97 = vector.extract_strided_slice %1 {offsets = [64, 0], sizes = [32, 128], strides = [1, 1]} : vector<224x128xf32> to vector<32x128xf32>
    %cst_16 = arith.constant dense<0.000000e+00> : vector<16x128xf32>
    %98 = tpu.matmul %96, %97, %cst_16 {dimension_numbers = #tpu.dot_dimension_numbers<[1], [0], [0], [1], [0, 0, 1, 1], [], []>} : vector<16x32xf32>, vector<32x128xf32>, vector<16x128xf32> -> vector<16x128xf32>
    %99 = vector.extract_strided_slice %2 {offsets = [1, 0], sizes = [1, 128], strides = [1, 1]} : vector<8x128xf32> to vector<1x128xf32>
    %100 = vector.broadcast %99 : vector<1x128xf32> to vector<16x128xf32>
    %101 = arith.addf %98, %100 : vector<16x128xf32>
    %cst_17 = arith.constant 5.000000e-01 : f32
    %102 = vector.broadcast %cst_17 : f32 to vector<16x128xf32>
    %103 = arith.mulf %102, %101 : vector<16x128xf32>
    %cst_18 = arith.constant 0.707106769 : f32
    %104 = vector.broadcast %cst_18 : f32 to vector<16x128xf32>
    %105 = arith.mulf %101, %104 : vector<16x128xf32>
    %106 = math.erf %105 : vector<16x128xf32>
    %cst_19 = arith.constant 1.000000e+00 : f32
    %107 = vector.broadcast %cst_19 : f32 to vector<16x128xf32>
    %108 = arith.addf %107, %106 : vector<16x128xf32>
    %109 = arith.mulf %103, %108 : vector<16x128xf32>
    %110 = vector.extract_strided_slice %1 {offsets = [96, 0], sizes = [128, 128], strides = [1, 1]} : vector<224x128xf32> to vector<128x128xf32>
    %cst_20 = arith.constant dense<0.000000e+00> : vector<16x128xf32>
    %111 = tpu.matmul %109, %110, %cst_20 {dimension_numbers = #tpu.dot_dimension_numbers<[1], [0], [0], [1], [0, 0, 1, 1], [], []>} : vector<16x128xf32>, vector<128x128xf32>, vector<16x128xf32> -> vector<16x128xf32>
    %112 = vector.extract_strided_slice %111 {offsets = [0, 0], sizes = [16, 32], strides = [1, 1]} : vector<16x128xf32> to vector<16x32xf32>
    %113 = vector.broadcast %71 : vector<1x32xf32> to vector<16x32xf32>
    %114 = arith.addf %112, %113 : vector<16x32xf32>
    %115 = arith.addf %114, %96 : vector<16x32xf32>
    %cst_21 = arith.constant dense<0.000000e+00> : vector<16xf32>
    %116 = vector.multi_reduction <add>, %115, %cst_21 [1] : vector<16x32xf32> to vector<16xf32>
    %117 = vector.shape_cast %116 : vector<16xf32> to vector<16x1xf32>
    %cst_22 = arith.constant 3.200000e+01 : f32
    %118 = vector.broadcast %cst_22 : f32 to vector<16x1xf32>
    %119 = arith.divf %117, %118 : vector<16x1xf32>
    %120 = vector.broadcast %119 : vector<16x1xf32> to vector<16x32xf32>
    %121 = arith.subf %115, %120 : vector<16x32xf32>
    %122 = arith.mulf %121, %121 : vector<16x32xf32>
    %cst_23 = arith.constant dense<0.000000e+00> : vector<16xf32>
    %123 = vector.multi_reduction <add>, %122, %cst_23 [1] : vector<16x32xf32> to vector<16xf32>
    %124 = vector.shape_cast %123 : vector<16xf32> to vector<16x1xf32>
    %cst_24 = arith.constant 3.200000e+01 : f32
    %125 = vector.broadcast %cst_24 : f32 to vector<16x1xf32>
    %126 = arith.divf %124, %125 : vector<16x1xf32>
    %cst_25 = arith.constant 9.99999974E-6 : f32
    %127 = vector.broadcast %cst_25 : f32 to vector<16x1xf32>
    %128 = arith.addf %126, %127 : vector<16x1xf32>
    %129 = math.rsqrt %128 : vector<16x1xf32>
    %130 = vector.broadcast %119 : vector<16x1xf32> to vector<16x32xf32>
    %131 = arith.subf %115, %130 : vector<16x32xf32>
    %132 = vector.broadcast %129 : vector<16x1xf32> to vector<16x32xf32>
    %133 = arith.mulf %131, %132 : vector<16x32xf32>
    %134 = vector.broadcast %72 : vector<1x32xf32> to vector<16x32xf32>
    %135 = arith.mulf %133, %134 : vector<16x32xf32>
    %136 = vector.broadcast %73 : vector<1x32xf32> to vector<16x32xf32>
    %137 = arith.addf %135, %136 : vector<16x32xf32>
    %c0_26 = arith.constant 0 : index
    %c0_27 = arith.constant 0 : index
    %138 = vector.load %arg3[%c0_26, %c0_27] : memref<16x32xf32, #tpu.memory_space<vmem>>, vector<16x32xf32>
    tpu.vector_store %arg3[%c0_26, %c0_27], %137 {strides = array<i32>} : memref<16x32xf32, #tpu.memory_space<vmem>>, vector<16x32xf32>,
    return
  }
}

</mosaic_0001>

<llo_original>
// kernel: transformer_block.1
$region0: #{transformer_block.1}
  #allocation0 [shape = 'u32[]', space=smem, size = 0x4, offset = 0x4, fixed_abs, tag = 'smem constant byte address 0x4 - core index']
  #allocation1 [shape = 'u32[144,128]{1,0:T(1,128)}', space=vmem, size = 0x12000, scoped, tag = 'internal scratch']
  %s0 = inlined_call_operand.vmem [shape: f32[16,32], index: 0, kind: input, shape index: {}]
  %s1 = inlined_call_operand.vmem [shape: f32[224,128], index: 1, kind: input, shape index: {}]
  %s2 = inlined_call_operand.vmem [shape: f32[8,128], index: 2, kind: input, shape index: {}]
  %s3 = inlined_call_operand.hbm [shape: f32[16,32], index: 3, kind: output, shape index: {}]
  %s4 = sld [smem:[#allocation0]]
  $region22: #{transformer_block.1} parent=0
    _
  %s6 = ssub.s32 1, %s4
  %s7 = scalar_select 0, %s6, %s4
  $region1: #{transformer_block.1} parent=0
    #allocation2 [shape = 'u8[8192]{0}', space=vmem, size = 0x2000, scoped, tag = 'output window, operand 0, single buffered']
    #allocation3 [shape = 's32[1]{0}', space=sflag, size = 0x4, scoped, tag = 'scoped memory for transformer_block.1']
    %8 = vsyncpa [#allocation3], 0
    // Predicated region
    $region2: #{transformer_block.1} parent=1 // pred_check
      _
    $region3: #{transformer_block.1} parent=1 // pred_check_branch
      %10 = sbr.rel (0) target = $region5
    $region4: #{transformer_block.1} parent=1 // pred_region
      _
    $region5: #{transformer_block.1} parent=1 // pred_fallthru
      _
    // Predicated region
    $region6: #{transformer_block.1} parent=1 // pred_check
      _
    $region7: #{transformer_block.1} parent=1 // pred_check_branch
      %12 = sbr.rel (0) target = $region9
    $region8: #{transformer_block.1} parent=1 // pred_region
      _
    $region9: #{transformer_block.1} parent=1 // pred_fallthru
      _
    // Predicated region
    $region10: #{transformer_block.1} parent=1 // pred_check
      _
    $region11: #{transformer_block.1} parent=1 // pred_check_branch
      %14 = sbr.rel (0) target = $region13
    $region12: #{transformer_block.1} parent=1 // pred_region
      _
    $region13: #{transformer_block.1} parent=1 // pred_fallthru
      _
    %v15 = vld [vmem:[%s0] sm:$0xff]
    %v16 = vld [vmem:[%s0 + $0x8] sm:$0xff]
    %v17 = vld [vmem:[%s1] sm:$0xff]
    %v18 = vld [vmem:[%s1 + $0x8] sm:$0xff]
    %v19 = vld [vmem:[%s1 + $0x10] sm:$0xff]
    %v20 = vld [vmem:[%s1 + $0x18] sm:$0xff]
    %v21 = vld [vmem:[%s1 + $0x20] sm:$0xff]
    %v22 = vld [vmem:[%s1 + $0x28] sm:$0xff]
    %v23 = vld [vmem:[%s1 + $0x30] sm:$0xff]
    %v24 = vld [vmem:[%s1 + $0x38] sm:$0xff]
    %v25 = vld [vmem:[%s1 + $0x40] sm:$0xff]
    %v26 = vld [vmem:[%s1 + $0x48] sm:$0xff]
    %v27 = vld [vmem:[%s1 + $0x50] sm:$0xff]
    %v28 = vld [vmem:[%s1 + $0x58] sm:$0xff]
    %v29 = vld [vmem:[%s1 + $0x60] sm:$0xff]
    %v30 = vld [vmem:[%s1 + $0x68] sm:$0xff]
    %v31 = vld [vmem:[%s1 + $0x70] sm:$0xff]
    %v32 = vld [vmem:[%s1 + $0x78] sm:$0xff]
    %v33 = vld [vmem:[%s1 + $0x80] sm:$0xff]
    %v34 = vld [vmem:[%s1 + $0x88] sm:$0xff]
    %v35 = vld [vmem:[%s1 + $0x90] sm:$0xff]
    %v36 = vld [vmem:[%s1 + $0x98] sm:$0xff]
    %v37 = vld [vmem:[%s1 + $0xa0] sm:$0xff]
    %v38 = vld [vmem:[%s1 + $0xa8] sm:$0xff]
    %v39 = vld [vmem:[%s1 + $0xb0] sm:$0xff]
    %v40 = vld [vmem:[%s1 + $0xb8] sm:$0xff]
    %v41 = vld [vmem:[%s1 + $0xc0] sm:$0xff]
    %v42 = vld [vmem:[%s1 + $0xc8] sm:$0xff]
    %v43 = vld [vmem:[%s1 + $0xd0] sm:$0xff]
    %v44 = vld [vmem:[%s1 + $0xd8] sm:$0xff]
    %v45 = vld [vmem:[%s2] sm:$0xff]
    %v46 = vlaneseq
    %v47 = vshrl.u32 %v46, 7
    %v48 = vsub.s32 0, %v47
    %v49 = vrot.slane %v45, %v48
    %vm50 = vcmask 261120
    %v52 = vsel %vm50, %v15, 0
    %v55 = vsel %vm50, %v16, 0
    %57 = vmatprep.subr.mxu0 0.0
    %58 = vmatpush1.msra.mxu0 0.0
    %59 = vmatprep.subr.mxu0 0.0
    %60 = vmatpush1.msra.mxu0 0.0
    %61 = vmatprep.subr.mxu0 0.0
    %62 = vmatpush1.msra.mxu0 0.0
    %63 = vmatprep.subr.mxu0 0.0
    %64 = vmatpush1.msra.mxu0 0.0
    %65 = vmatprep.subr.mxu0 0.0
    %66 = vmatpush1.msra.mxu0 0.0
    %67 = vmatprep.subr.mxu0 0.0
    %68 = vmatpush1.msra.mxu0 0.0
    %69 = vmatprep.subr.mxu0 0.0
    %70 = vmatpush1.msra.mxu0 0.0
    %71 = vmatprep.subr.mxu0 0.0
    %72 = vmatpush1.msra.mxu0 0.0
    %73 = vmatprep.subr.mxu0 0.0
    %74 = vmatpush1.msra.mxu0 0.0
    %75 = vmatprep.subr.mxu0 0.0
    %76 = vmatpush1.msra.mxu0 0.0
    %77 = vmatprep.subr.mxu0 0.0
    %78 = vmatpush1.msra.mxu0 0.0
    %79 = vmatprep.subr.mxu0 0.0
    %80 = vmatpush1.msra.mxu0 0.0
    %81 = vmatprep.subr.mxu0 0.0
    %82 = vmatpush1.msra.mxu0 %v20
    %83 = vmatprep.subr.mxu0 0.0
    %84 = vmatpush1.msra.mxu0 %v19
    %85 = vmatprep.subr.mxu0 0.0
    %86 = vmatpush1.msra.mxu0 %v18
    %87 = vmatprep.subr.mxu0 0.0
    %88 = vmatpush1.msra.mxu0 %v17
    %89 = vmatprep.subr.mxu0 0.0
    %90 = vmatpush2.msra.mxu0 0.0
    %91 = vmatprep.subr.mxu0 0.0
    %92 = vmatpush2.msra.mxu0 0.0
    %93 = vmatprep.subr.mxu0 0.0
    %94 = vmatpush2.msra.mxu0 0.0
    %95 = vmatprep.subr.mxu0 0.0
    %96 = vmatpush2.msra.mxu0 0.0
    %97 = vmatprep.subr.mxu0 0.0
    %98 = vmatpush2.msra.mxu0 0.0
    %99 = vmatprep.subr.mxu0 0.0
    %100 = vmatpush2.msra.mxu0 0.0
    %101 = vmatprep.subr.mxu0 0.0
    %102 = vmatpush2.msra.mxu0 0.0
    %103 = vmatprep.subr.mxu0 0.0
    %104 = vmatpush2.msra.mxu0 0.0
    %105 = vmatprep.subr.mxu0 0.0
    %106 = vmatpush2.msra.mxu0 0.0
    %107 = vmatprep.subr.mxu0 0.0
    %108 = vmatpush2.msra.mxu0 0.0
    %109 = vmatprep.subr.mxu0 0.0
    %110 = vmatpush2.msra.mxu0 0.0
    %111 = vmatprep.subr.mxu0 0.0
    %112 = vmatpush2.msra.mxu0 0.0
    %113 = vmatprep.subr.mxu0 0.0
    %114 = vmatpush2.msra.mxu0 0.0
    %115 = vmatprep.subr.mxu0 0.0
    %116 = vmatpush2.msra.mxu0 0.0
    %117 = vmatprep.subr.mxu0 0.0
    %118 = vmatpush2.msra.mxu0 0.0
    %119 = vmatprep.subr.mxu0 0.0
    %120 = vmatpush2.msra.mxu0 0.0
    %121 = vmatprep.mubr.f32.mxu0 0.0
    %122 = vmatmul.mubr.f32.gmra.mxu0 %v52
    %v123 = vpop.f32.mrf.mxu0
    %v124 = vadd.f32 %v49, %v123
    %v125 = vpop.f32.mrf.mxu0
    %126 = vmatprep.mubr.f32.mxu0 0.0
    %127 = vmatmul.mubr.f32.gmra.mxu0 %v55
    %v128 = vpop.f32.mrf.mxu0
    %v129 = vadd.f32 %v49, %v128
    %v130 = vpop.f32.mrf.mxu0
    %131 = vdwg.mxu0
    %134 = vrot.lane.b32.xlu0 %v124, 120
    %v135 = vpop.permute.xlu0 %134
    %136 = vrot.lane.b32.xlu0 %v129, 120
    %v137 = vpop.permute.xlu0 %136
    %138 = vrot.lane.b32.xlu0 %v124, 112
    %v139 = vpop.permute.xlu0 %138
    %140 = vrot.lane.b32.xlu0 %v129, 112
    %v141 = vpop.permute.xlu0 %140
    %142 = vrot.lane.b32.xlu0 %v124, 104
    %v143 = vpop.permute.xlu0 %142
    %144 = vrot.lane.b32.xlu0 %v129, 104
    %v145 = vpop.permute.xlu0 %144
    %146 = vrot.lane.b32.xlu0 %v124, 96
    %v147 = vpop.permute.xlu0 %146
    %vm148 = vcmask 64512
    %v149 = vsel %vm148, %v124, 0
    %v151 = vsel %vm148, %v147, 0
    %153 = vmatprep.subr.mxu0 0.0
    %154 = vmatpush1.xpose.msra.mxu0 0.0
    %155 = vmatprep.subr.mxu0 0.0
    %156 = vmatpush1.xpose.msra.mxu0 0.0
    %157 = vmatprep.subr.mxu0 0.0
    %158 = vmatpush1.xpose.msra.mxu0 0.0
    %159 = vmatprep.subr.mxu0 0.0
    %160 = vmatpush1.xpose.msra.mxu0 0.0
    %161 = vmatprep.subr.mxu0 0.0
    %162 = vmatpush1.xpose.msra.mxu0 0.0
    %163 = vmatprep.subr.mxu0 0.0
    %164 = vmatpush1.xpose.msra.mxu0 0.0
    %165 = vmatprep.subr.mxu0 0.0
    %166 = vmatpush1.xpose.msra.mxu0 0.0
    %167 = vmatprep.subr.mxu0 0.0
    %168 = vmatpush1.xpose.msra.mxu0 0.0
    %169 = vmatprep.subr.mxu0 0.0
    %170 = vmatpush1.xpose.msra.mxu0 0.0
    %171 = vmatprep.subr.mxu0 0.0
    %172 = vmatpush1.xpose.msra.mxu0 0.0
    %173 = vmatprep.subr.mxu0 0.0
    %174 = vmatpush1.xpose.msra.mxu0 0.0
    %175 = vmatprep.subr.mxu0 0.0
    %176 = vmatpush1.xpose.msra.mxu0 0.0
    %177 = vmatprep.subr.mxu0 0.0
    %178 = vmatpush1.xpose.msra.mxu0 0.0
    %179 = vmatprep.subr.mxu0 0.0
    %180 = vmatpush1.xpose.msra.mxu0 0.0
    %181 = vmatprep.subr.mxu0 0.0
    %182 = vmatpush1.xpose.msra.mxu0 0.0
    %183 = vmatprep.subr.mxu0 0.0
    %184 = vmatpush1.xpose.msra.mxu0 %v151
    %185 = vmatprep.subr.mxu0 0.0
    %186 = vmatpush2.xpose.msra.mxu0 0.0
    %187 = vmatprep.subr.mxu0 0.0
    %188 = vmatpush2.xpose.msra.mxu0 0.0
    %189 = vmatprep.subr.mxu0 0.0
    %190 = vmatpush2.xpose.msra.mxu0 0.0
    %191 = vmatprep.subr.mxu0 0.0
    %192 = vmatpush2.xpose.msra.mxu0 0.0
    %193 = vmatprep.subr.mxu0 0.0
    %194 = vmatpush2.xpose.msra.mxu0 0.0
    %195 = vmatprep.subr.mxu0 0.0
    %196 = vmatpush2.xpose.msra.mxu0 0.0
    %197 = vmatprep.subr.mxu0 0.0
    %198 = vmatpush2.xpose.msra.mxu0 0.0
    %199 = vmatprep.subr.mxu0 0.0
    %200 = vmatpush2.xpose.msra.mxu0 0.0
    %201 = vmatprep.subr.mxu0 0.0
    %202 = vmatpush2.xpose.msra.mxu0 0.0
    %203 = vmatprep.subr.mxu0 0.0
    %204 = vmatpush2.xpose.msra.mxu0 0.0
    %205 = vmatprep.subr.mxu0 0.0
    %206 = vmatpush2.xpose.msra.mxu0 0.0
    %207 = vmatprep.subr.mxu0 0.0
    %208 = vmatpush2.xpose.msra.mxu0 0.0
    %209 = vmatprep.subr.mxu0 0.0
    %210 = vmatpush2.xpose.msra.mxu0 0.0
    %211 = vmatprep.subr.mxu0 0.0
    %212 = vmatpush2.xpose.msra.mxu0 0.0
    %213 = vmatprep.subr.mxu0 0.0
    %214 = vmatpush2.xpose.msra.mxu0 0.0
    %215 = vmatprep.subr.mxu0 0.0
    %216 = vmatpush2.xpose.msra.mxu0 0.0
    %217 = vmatprep.mubr.f32.mxu0 0.0
    %218 = vmatmul.mubr.f32.gmra.mxu0 %v149
    %v219 = vpop.f32.mrf.mxu0
    %v220 = vadd.f32 0.0, %v219
    %v221 = vpop.f32.mrf.mxu0
    %222 = vdwg.mxu0
    %223 = vrot.lane.b32.xlu0 %v129, 96
    %v224 = vpop.permute.xlu0 %223
    %v225 = vsel %vm148, %v129, 0
    %v227 = vsel %vm148, %v224, 0
    %229 = vmatprep.subr.mxu0 0.0
    %230 = vmatpush1.xpose.msra.mxu0 0.0
    %231 = vmatprep.subr.mxu0 0.0
    %232 = vmatpush1.xpose.msra.mxu0 0.0
    %233 = vmatprep.subr.mxu0 0.0
    %234 = vmatpush1.xpose.msra.mxu0 0.0
    %235 = vmatprep.subr.mxu0 0.0
    %236 = vmatpush1.xpose.msra.mxu0 0.0
    %237 = vmatprep.subr.mxu0 0.0
    %238 = vmatpush1.xpose.msra.mxu0 0.0
    %239 = vmatprep.subr.mxu0 0.0
    %240 = vmatpush1.xpose.msra.mxu0 0.0
    %241 = vmatprep.subr.mxu0 0.0
    %242 = vmatpush1.xpose.msra.mxu0 0.0
    %243 = vmatprep.subr.mxu0 0.0
    %244 = vmatpush1.xpose.msra.mxu0 0.0
    %245 = vmatprep.subr.mxu0 0.0
    %246 = vmatpush1.xpose.msra.mxu0 0.0
    %247 = vmatprep.subr.mxu0 0.0
    %248 = vmatpush1.xpose.msra.mxu0 0.0
    %249 = vmatprep.subr.mxu0 0.0
    %250 = vmatpush1.xpose.msra.mxu0 0.0
    %251 = vmatprep.subr.mxu0 0.0
    %252 = vmatpush1.xpose.msra.mxu0 0.0
    %253 = vmatprep.subr.mxu0 0.0
    %254 = vmatpush1.xpose.msra.mxu0 0.0
    %255 = vmatprep.subr.mxu0 0.0
    %256 = vmatpush1.xpose.msra.mxu0 0.0
    %257 = vmatprep.subr.mxu0 0.0
    %258 = vmatpush1.xpose.msra.mxu0 0.0
    %259 = vmatprep.subr.mxu0 0.0
    %260 = vmatpush1.xpose.msra.mxu0 %v227
    %261 = vmatprep.subr.mxu0 0.0
    %262 = vmatpush2.xpose.msra.mxu0 0.0
    %263 = vmatprep.subr.mxu0 0.0
    %264 = vmatpush2.xpose.msra.mxu0 0.0
    %265 = vmatprep.subr.mxu0 0.0
    %266 = vmatpush2.xpose.msra.mxu0 0.0
    %267 = vmatprep.subr.mxu0 0.0
    %268 = vmatpush2.xpose.msra.mxu0 0.0
    %269 = vmatprep.subr.mxu0 0.0
    %270 = vmatpush2.xpose.msra.mxu0 0.0
    %271 = vmatprep.subr.mxu0 0.0
    %272 = vmatpush2.xpose.msra.mxu0 0.0
    %273 = vmatprep.subr.mxu0 0.0
    %274 = vmatpush2.xpose.msra.mxu0 0.0
    %275 = vmatprep.subr.mxu0 0.0
    %276 = vmatpush2.xpose.msra.mxu0 0.0
    %277 = vmatprep.subr.mxu0 0.0
    %278 = vmatpush2.xpose.msra.mxu0 0.0
    %279 = vmatprep.subr.mxu0 0.0
    %280 = vmatpush2.xpose.msra.mxu0 0.0
    %281 = vmatprep.subr.mxu0 0.0
    %282 = vmatpush2.xpose.msra.mxu0 0.0
    %283 = vmatprep.subr.mxu0 0.0
    %284 = vmatpush2.xpose.msra.mxu0 0.0
    %285 = vmatprep.subr.mxu0 0.0
    %286 = vmatpush2.xpose.msra.mxu0 0.0
    %287 = vmatprep.subr.mxu0 0.0
    %288 = vmatpush2.xpose.msra.mxu0 0.0
    %289 = vmatprep.subr.mxu0 0.0
    %290 = vmatpush2.xpose.msra.mxu0 0.0
    %291 = vmatprep.subr.mxu0 0.0
    %292 = vmatpush2.xpose.msra.mxu0 0.0
    %293 = vmatprep.mubr.f32.mxu0 0.0
    %294 = vmatmul.mubr.f32.gmra.mxu0 %v225
    %v295 = vpop.f32.mrf.mxu0
    %v296 = vadd.f32 0.0, %v295
    %v297 = vpop.f32.mrf.mxu0
    %298 = vdwg.mxu0
    %299 = vrot.lane.b32.xlu0 %v135, 96
    %v300 = vpop.permute.xlu0 %299
    %v301 = vsel %vm148, %v135, 0
    %v303 = vsel %vm148, %v300, 0
    %305 = vmatprep.subr.mxu0 0.0
    %306 = vmatpush1.xpose.msra.mxu0 0.0
    %307 = vmatprep.subr.mxu0 0.0
    %308 = vmatpush1.xpose.msra.mxu0 0.0
    %309 = vmatprep.subr.mxu0 0.0
    %310 = vmatpush1.xpose.msra.mxu0 0.0
    %311 = vmatprep.subr.mxu0 0.0
    %312 = vmatpush1.xpose.msra.mxu0 0.0
    %313 = vmatprep.subr.mxu0 0.0
    %314 = vmatpush1.xpose.msra.mxu0 0.0
    %315 = vmatprep.subr.mxu0 0.0
    %316 = vmatpush1.xpose.msra.mxu0 0.0
    %317 = vmatprep.subr.mxu0 0.0
    %318 = vmatpush1.xpose.msra.mxu0 0.0
    %319 = vmatprep.subr.mxu0 0.0
    %320 = vmatpush1.xpose.msra.mxu0 0.0
    %321 = vmatprep.subr.mxu0 0.0
    %322 = vmatpush1.xpose.msra.mxu0 0.0
    %323 = vmatprep.subr.mxu0 0.0
    %324 = vmatpush1.xpose.msra.mxu0 0.0
    %325 = vmatprep.subr.mxu0 0.0
    %326 = vmatpush1.xpose.msra.mxu0 0.0
    %327 = vmatprep.subr.mxu0 0.0
    %328 = vmatpush1.xpose.msra.mxu0 0.0
    %329 = vmatprep.subr.mxu0 0.0
    %330 = vmatpush1.xpose.msra.mxu0 0.0
    %331 = vmatprep.subr.mxu0 0.0
    %332 = vmatpush1.xpose.msra.mxu0 0.0
    %333 = vmatprep.subr.mxu0 0.0
    %334 = vmatpush1.xpose.msra.mxu0 0.0
    %335 = vmatprep.subr.mxu0 0.0
    %336 = vmatpush1.xpose.msra.mxu0 %v303
    %337 = vmatprep.subr.mxu0 0.0
    %338 = vmatpush2.xpose.msra.mxu0 0.0
    %339 = vmatprep.subr.mxu0 0.0
    %340 = vmatpush2.xpose.msra.mxu0 0.0
    %341 = vmatprep.subr.mxu0 0.0
    %342 = vmatpush2.xpose.msra.mxu0 0.0
    %343 = vmatprep.subr.mxu0 0.0
    %344 = vmatpush2.xpose.msra.mxu0 0.0
    %345 = vmatprep.subr.mxu0 0.0
    %346 = vmatpush2.xpose.msra.mxu0 0.0
    %347 = vmatprep.subr.mxu0 0.0
    %348 = vmatpush2.xpose.msra.mxu0 0.0
    %349 = vmatprep.subr.mxu0 0.0
    %350 = vmatpush2.xpose.msra.mxu0 0.0
    %351 = vmatprep.subr.mxu0 0.0
    %352 = vmatpush2.xpose.msra.mxu0 0.0
    %353 = vmatprep.subr.mxu0 0.0
    %354 = vmatpush2.xpose.msra.mxu0 0.0
    %355 = vmatprep.subr.mxu0 0.0
    %356 = vmatpush2.xpose.msra.mxu0 0.0
    %357 = vmatprep.subr.mxu0 0.0
    %358 = vmatpush2.xpose.msra.mxu0 0.0
    %359 = vmatprep.subr.mxu0 0.0
    %360 = vmatpush2.xpose.msra.mxu0 0.0
    %361 = vmatprep.subr.mxu0 0.0
    %362 = vmatpush2.xpose.msra.mxu0 0.0
    %363 = vmatprep.subr.mxu0 0.0
    %364 = vmatpush2.xpose.msra.mxu0 0.0
    %365 = vmatprep.subr.mxu0 0.0
    %366 = vmatpush2.xpose.msra.mxu0 0.0
    %367 = vmatprep.subr.mxu0 0.0
    %368 = vmatpush2.xpose.msra.mxu0 0.0
    %369 = vmatprep.mubr.f32.mxu0 0.0
    %370 = vmatmul.mubr.f32.gmra.mxu0 %v301
    %v371 = vpop.f32.mrf.mxu0
    %v372 = vadd.f32 0.0, %v371
    %v373 = vpop.f32.mrf.mxu0
    %374 = vdwg.mxu0
    %375 = vrot.lane.b32.xlu0 %v137, 96
    %v376 = vpop.permute.xlu0 %375
    %v377 = vsel %vm148, %v137, 0
    %v379 = vsel %vm148, %v376, 0
    %381 = vmatprep.subr.mxu0 0.0
    %382 = vmatpush1.xpose.msra.mxu0 0.0
    %383 = vmatprep.subr.mxu0 0.0
    %384 = vmatpush1.xpose.msra.mxu0 0.0
    %385 = vmatprep.subr.mxu0 0.0
    %386 = vmatpush1.xpose.msra.mxu0 0.0
    %387 = vmatprep.subr.mxu0 0.0
    %388 = vmatpush1.xpose.msra.mxu0 0.0
    %389 = vmatprep.subr.mxu0 0.0
    %390 = vmatpush1.xpose.msra.mxu0 0.0
    %391 = vmatprep.subr.mxu0 0.0
    %392 = vmatpush1.xpose.msra.mxu0 0.0
    %393 = vmatprep.subr.mxu0 0.0
    %394 = vmatpush1.xpose.msra.mxu0 0.0
    %395 = vmatprep.subr.mxu0 0.0
    %396 = vmatpush1.xpose.msra.mxu0 0.0
    %397 = vmatprep.subr.mxu0 0.0
    %398 = vmatpush1.xpose.msra.mxu0 0.0
    %399 = vmatprep.subr.mxu0 0.0
    %400 = vmatpush1.xpose.msra.mxu0 0.0
    %401 = vmatprep.subr.mxu0 0.0
    %402 = vmatpush1.xpose.msra.mxu0 0.0
    %403 = vmatprep.subr.mxu0 0.0
    %404 = vmatpush1.xpose.msra.mxu0 0.0
    %405 = vmatprep.subr.mxu0 0.0
    %406 = vmatpush1.xpose.msra.mxu0 0.0
    %407 = vmatprep.subr.mxu0 0.0
    %408 = vmatpush1.xpose.msra.mxu0 0.0
    %409 = vmatprep.subr.mxu0 0.0
    %410 = vmatpush1.xpose.msra.mxu0 0.0
    %411 = vmatprep.subr.mxu0 0.0
    %412 = vmatpush1.xpose.msra.mxu0 %v379
    %413 = vmatprep.subr.mxu0 0.0
    %414 = vmatpush2.xpose.msra.mxu0 0.0
    %415 = vmatprep.subr.mxu0 0.0
    %416 = vmatpush2.xpose.msra.mxu0 0.0
    %417 = vmatprep.subr.mxu0 0.0
    %418 = vmatpush2.xpose.msra.mxu0 0.0
    %419 = vmatprep.subr.mxu0 0.0
    %420 = vmatpush2.xpose.msra.mxu0 0.0
    %421 = vmatprep.subr.mxu0 0.0
    %422 = vmatpush2.xpose.msra.mxu0 0.0
    %423 = vmatprep.subr.mxu0 0.0
    %424 = vmatpush2.xpose.msra.mxu0 0.0
    %425 = vmatprep.subr.mxu0 0.0
    %426 = vmatpush2.xpose.msra.mxu0 0.0
    %427 = vmatprep.subr.mxu0 0.0
    %428 = vmatpush2.xpose.msra.mxu0 0.0
    %429 = vmatprep.subr.mxu0 0.0
    %430 = vmatpush2.xpose.msra.mxu0 0.0
    %431 = vmatprep.subr.mxu0 0.0
    %432 = vmatpush2.xpose.msra.mxu0 0.0
    %433 = vmatprep.subr.mxu0 0.0
    %434 = vmatpush2.xpose.msra.mxu0 0.0
    %435 = vmatprep.subr.mxu0 0.0
    %436 = vmatpush2.xpose.msra.mxu0 0.0
    %437 = vmatprep.subr.mxu0 0.0
    %438 = vmatpush2.xpose.msra.mxu0 0.0
    %439 = vmatprep.subr.mxu0 0.0
    %440 = vmatpush2.xpose.msra.mxu0 0.0
    %441 = vmatprep.subr.mxu0 0.0
    %442 = vmatpush2.xpose.msra.mxu0 0.0
    %443 = vmatprep.subr.mxu0 0.0
    %444 = vmatpush2.xpose.msra.mxu0 0.0
    %445 = vmatprep.mubr.f32.mxu0 0.0
    %446 = vmatmul.mubr.f32.gmra.mxu0 %v377
    %v447 = vpop.f32.mrf.mxu0
    %v448 = vadd.f32 0.0, %v447
    %v449 = vpop.f32.mrf.mxu0
    %450 = vdwg.mxu0
    %451 = vrot.lane.b32.xlu0 %v139, 96
    %v452 = vpop.permute.xlu0 %451
    %v453 = vsel %vm148, %v139, 0
    %v455 = vsel %vm148, %v452, 0
    %457 = vmatprep.subr.mxu0 0.0
    %458 = vmatpush1.xpose.msra.mxu0 0.0
    %459 = vmatprep.subr.mxu0 0.0
    %460 = vmatpush1.xpose.msra.mxu0 0.0
    %461 = vmatprep.subr.mxu0 0.0
    %462 = vmatpush1.xpose.msra.mxu0 0.0
    %463 = vmatprep.subr.mxu0 0.0
    %464 = vmatpush1.xpose.msra.mxu0 0.0
    %465 = vmatprep.subr.mxu0 0.0
    %466 = vmatpush1.xpose.msra.mxu0 0.0
    %467 = vmatprep.subr.mxu0 0.0
    %468 = vmatpush1.xpose.msra.mxu0 0.0
    %469 = vmatprep.subr.mxu0 0.0
    %470 = vmatpush1.xpose.msra.mxu0 0.0
    %471 = vmatprep.subr.mxu0 0.0
    %472 = vmatpush1.xpose.msra.mxu0 0.0
    %473 = vmatprep.subr.mxu0 0.0
    %474 = vmatpush1.xpose.msra.mxu0 0.0
    %475 = vmatprep.subr.mxu0 0.0
    %476 = vmatpush1.xpose.msra.mxu0 0.0
    %477 = vmatprep.subr.mxu0 0.0
    %478 = vmatpush1.xpose.msra.mxu0 0.0
    %479 = vmatprep.subr.mxu0 0.0
    %480 = vmatpush1.xpose.msra.mxu0 0.0
    %481 = vmatprep.subr.mxu0 0.0
    %482 = vmatpush1.xpose.msra.mxu0 0.0
    %483 = vmatprep.subr.mxu0 0.0
    %484 = vmatpush1.xpose.msra.mxu0 0.0
    %485 = vmatprep.subr.mxu0 0.0
    %486 = vmatpush1.xpose.msra.mxu0 0.0
    %487 = vmatprep.subr.mxu0 0.0
    %488 = vmatpush1.xpose.msra.mxu0 %v455
    %489 = vmatprep.subr.mxu0 0.0
    %490 = vmatpush2.xpose.msra.mxu0 0.0
    %491 = vmatprep.subr.mxu0 0.0
    %492 = vmatpush2.xpose.msra.mxu0 0.0
    %493 = vmatprep.subr.mxu0 0.0
    %494 = vmatpush2.xpose.msra.mxu0 0.0
    %495 = vmatprep.subr.mxu0 0.0
    %496 = vmatpush2.xpose.msra.mxu0 0.0
    %497 = vmatprep.subr.mxu0 0.0
    %498 = vmatpush2.xpose.msra.mxu0 0.0
    %499 = vmatprep.subr.mxu0 0.0
    %500 = vmatpush2.xpose.msra.mxu0 0.0
    %501 = vmatprep.subr.mxu0 0.0
    %502 = vmatpush2.xpose.msra.mxu0 0.0
    %503 = vmatprep.subr.mxu0 0.0
    %504 = vmatpush2.xpose.msra.mxu0 0.0
    %505 = vmatprep.subr.mxu0 0.0
    %506 = vmatpush2.xpose.msra.mxu0 0.0
    %507 = vmatprep.subr.mxu0 0.0
    %508 = vmatpush2.xpose.msra.mxu0 0.0
    %509 = vmatprep.subr.mxu0 0.0
    %510 = vmatpush2.xpose.msra.mxu0 0.0
    %511 = vmatprep.subr.mxu0 0.0
    %512 = vmatpush2.xpose.msra.mxu0 0.0
    %513 = vmatprep.subr.mxu0 0.0
    %514 = vmatpush2.xpose.msra.mxu0 0.0
    %515 = vmatprep.subr.mxu0 0.0
    %516 = vmatpush2.xpose.msra.mxu0 0.0
    %517 = vmatprep.subr.mxu0 0.0
    %518 = vmatpush2.xpose.msra.mxu0 0.0
    %519 = vmatprep.subr.mxu0 0.0
    %520 = vmatpush2.xpose.msra.mxu0 0.0
    %521 = vmatprep.mubr.f32.mxu0 0.0
    %522 = vmatmul.mubr.f32.gmra.mxu0 %v453
    %v523 = vpop.f32.mrf.mxu0
    %v524 = vadd.f32 0.0, %v523
    %v525 = vpop.f32.mrf.mxu0
    %526 = vdwg.mxu0
    %527 = vrot.lane.b32.xlu0 %v141, 96
    %v528 = vpop.permute.xlu0 %527
    %v529 = vsel %vm148, %v141, 0
    %v531 = vsel %vm148, %v528, 0
    %533 = vmatprep.subr.mxu0 0.0
    %534 = vmatpush1.xpose.msra.mxu0 0.0
    %535 = vmatprep.subr.mxu0 0.0
    %536 = vmatpush1.xpose.msra.mxu0 0.0
    %537 = vmatprep.subr.mxu0 0.0
    %538 = vmatpush1.xpose.msra.mxu0 0.0
    %539 = vmatprep.subr.mxu0 0.0
    %540 = vmatpush1.xpose.msra.mxu0 0.0
    %541 = vmatprep.subr.mxu0 0.0
    %542 = vmatpush1.xpose.msra.mxu0 0.0
    %543 = vmatprep.subr.mxu0 0.0
    %544 = vmatpush1.xpose.msra.mxu0 0.0
    %545 = vmatprep.subr.mxu0 0.0
    %546 = vmatpush1.xpose.msra.mxu0 0.0
    %547 = vmatprep.subr.mxu0 0.0
    %548 = vmatpush1.xpose.msra.mxu0 0.0
    %549 = vmatprep.subr.mxu0 0.0
    %550 = vmatpush1.xpose.msra.mxu0 0.0
    %551 = vmatprep.subr.mxu0 0.0
    %552 = vmatpush1.xpose.msra.mxu0 0.0
    %553 = vmatprep.subr.mxu0 0.0
    %554 = vmatpush1.xpose.msra.mxu0 0.0
    %555 = vmatprep.subr.mxu0 0.0
    %556 = vmatpush1.xpose.msra.mxu0 0.0
    %557 = vmatprep.subr.mxu0 0.0
    %558 = vmatpush1.xpose.msra.mxu0 0.0
    %559 = vmatprep.subr.mxu0 0.0
    %560 = vmatpush1.xpose.msra.mxu0 0.0
    %561 = vmatprep.subr.mxu0 0.0
    %562 = vmatpush1.xpose.msra.mxu0 0.0
    %563 = vmatprep.subr.mxu0 0.0
    %564 = vmatpush1.xpose.msra.mxu0 %v531
    %565 = vmatprep.subr.mxu0 0.0
    %566 = vmatpush2.xpose.msra.mxu0 0.0
    %567 = vmatprep.subr.mxu0 0.0
    %568 = vmatpush2.xpose.msra.mxu0 0.0
    %569 = vmatprep.subr.mxu0 0.0
    %570 = vmatpush2.xpose.msra.mxu0 0.0
    %571 = vmatprep.subr.mxu0 0.0
    %572 = vmatpush2.xpose.msra.mxu0 0.0
    %573 = vmatprep.subr.mxu0 0.0
    %574 = vmatpush2.xpose.msra.mxu0 0.0
    %575 = vmatprep.subr.mxu0 0.0
    %576 = vmatpush2.xpose.msra.mxu0 0.0
    %577 = vmatprep.subr.mxu0 0.0
    %578 = vmatpush2.xpose.msra.mxu0 0.0
    %579 = vmatprep.subr.mxu0 0.0
    %580 = vmatpush2.xpose.msra.mxu0 0.0
    %581 = vmatprep.subr.mxu0 0.0
    %582 = vmatpush2.xpose.msra.mxu0 0.0
    %583 = vmatprep.subr.mxu0 0.0
    %584 = vmatpush2.xpose.msra.mxu0 0.0
    %585 = vmatprep.subr.mxu0 0.0
    %586 = vmatpush2.xpose.msra.mxu0 0.0
    %587 = vmatprep.subr.mxu0 0.0
    %588 = vmatpush2.xpose.msra.mxu0 0.0
    %589 = vmatprep.subr.mxu0 0.0
    %590 = vmatpush2.xpose.msra.mxu0 0.0
    %591 = vmatprep.subr.mxu0 0.0
    %592 = vmatpush2.xpose.msra.mxu0 0.0
    %593 = vmatprep.subr.mxu0 0.0
    %594 = vmatpush2.xpose.msra.mxu0 0.0
    %595 = vmatprep.subr.mxu0 0.0
    %596 = vmatpush2.xpose.msra.mxu0 0.0
    %597 = vmatprep.mubr.f32.mxu0 0.0
    %598 = vmatmul.mubr.f32.gmra.mxu0 %v529
    %v599 = vpop.f32.mrf.mxu0
    %v600 = vadd.f32 0.0, %v599
    %v601 = vpop.f32.mrf.mxu0
    %602 = vdwg.mxu0
    %603 = vrot.lane.b32.xlu0 %v143, 96
    %v604 = vpop.permute.xlu0 %603
    %v605 = vsel %vm148, %v143, 0
    %v607 = vsel %vm148, %v604, 0
    %609 = vmatprep.subr.mxu0 0.0
    %610 = vmatpush1.xpose.msra.mxu0 0.0
    %611 = vmatprep.subr.mxu0 0.0
    %612 = vmatpush1.xpose.msra.mxu0 0.0
    %613 = vmatprep.subr.mxu0 0.0
    %614 = vmatpush1.xpose.msra.mxu0 0.0
    %615 = vmatprep.subr.mxu0 0.0
    %616 = vmatpush1.xpose.msra.mxu0 0.0
    %617 = vmatprep.subr.mxu0 0.0
    %618 = vmatpush1.xpose.msra.mxu0 0.0
    %619 = vmatprep.subr.mxu0 0.0
    %620 = vmatpush1.xpose.msra.mxu0 0.0
    %621 = vmatprep.subr.mxu0 0.0
    %622 = vmatpush1.xpose.msra.mxu0 0.0
    %623 = vmatprep.subr.mxu0 0.0
    %624 = vmatpush1.xpose.msra.mxu0 0.0
    %625 = vmatprep.subr.mxu0 0.0
    %626 = vmatpush1.xpose.msra.mxu0 0.0
    %627 = vmatprep.subr.mxu0 0.0
    %628 = vmatpush1.xpose.msra.mxu0 0.0
    %629 = vmatprep.subr.mxu0 0.0
    %630 = vmatpush1.xpose.msra.mxu0 0.0
    %631 = vmatprep.subr.mxu0 0.0
    %632 = vmatpush1.xpose.msra.mxu0 0.0
    %633 = vmatprep.subr.mxu0 0.0
    %634 = vmatpush1.xpose.msra.mxu0 0.0
    %635 = vmatprep.subr.mxu0 0.0
    %636 = vmatpush1.xpose.msra.mxu0 0.0
    %637 = vmatprep.subr.mxu0 0.0
    %638 = vmatpush1.xpose.msra.mxu0 0.0
    %639 = vmatprep.subr.mxu0 0.0
    %640 = vmatpush1.xpose.msra.mxu0 %v607
    %641 = vmatprep.subr.mxu0 0.0
    %642 = vmatpush2.xpose.msra.mxu0 0.0
    %643 = vmatprep.subr.mxu0 0.0
    %644 = vmatpush2.xpose.msra.mxu0 0.0
    %645 = vmatprep.subr.mxu0 0.0
    %646 = vmatpush2.xpose.msra.mxu0 0.0
    %647 = vmatprep.subr.mxu0 0.0
    %648 = vmatpush2.xpose.msra.mxu0 0.0
    %649 = vmatprep.subr.mxu0 0.0
    %650 = vmatpush2.xpose.msra.mxu0 0.0
    %651 = vmatprep.subr.mxu0 0.0
    %652 = vmatpush2.xpose.msra.mxu0 0.0
    %653 = vmatprep.subr.mxu0 0.0
    %654 = vmatpush2.xpose.msra.mxu0 0.0
    %655 = vmatprep.subr.mxu0 0.0
    %656 = vmatpush2.xpose.msra.mxu0 0.0
    %657 = vmatprep.subr.mxu0 0.0
    %658 = vmatpush2.xpose.msra.mxu0 0.0
    %659 = vmatprep.subr.mxu0 0.0
    %660 = vmatpush2.xpose.msra.mxu0 0.0
    %661 = vmatprep.subr.mxu0 0.0
    %662 = vmatpush2.xpose.msra.mxu0 0.0
    %663 = vmatprep.subr.mxu0 0.0
    %664 = vmatpush2.xpose.msra.mxu0 0.0
    %665 = vmatprep.subr.mxu0 0.0
    %666 = vmatpush2.xpose.msra.mxu0 0.0
    %667 = vmatprep.subr.mxu0 0.0
    %668 = vmatpush2.xpose.msra.mxu0 0.0
    %669 = vmatprep.subr.mxu0 0.0
    %670 = vmatpush2.xpose.msra.mxu0 0.0
    %671 = vmatprep.subr.mxu0 0.0
    %672 = vmatpush2.xpose.msra.mxu0 0.0
    %673 = vmatprep.mubr.f32.mxu0 0.0
    %674 = vmatmul.mubr.f32.gmra.mxu0 %v605
    %v675 = vpop.f32.mrf.mxu0
    %v676 = vadd.f32 0.0, %v675
    %v677 = vpop.f32.mrf.mxu0
    %678 = vdwg.mxu0
    %679 = vrot.lane.b32.xlu0 %v145, 96
    %v680 = vpop.permute.xlu0 %679
    %v681 = vsel %vm148, %v145, 0
    %v683 = vsel %vm148, %v680, 0
    %685 = vmatprep.subr.mxu0 0.0
    %686 = vmatpush1.xpose.msra.mxu0 0.0
    %687 = vmatprep.subr.mxu0 0.0
    %688 = vmatpush1.xpose.msra.mxu0 0.0
    %689 = vmatprep.subr.mxu0 0.0
    %690 = vmatpush1.xpose.msra.mxu0 0.0
    %691 = vmatprep.subr.mxu0 0.0
    %692 = vmatpush1.xpose.msra.mxu0 0.0
    %693 = vmatprep.subr.mxu0 0.0
    %694 = vmatpush1.xpose.msra.mxu0 0.0
    %695 = vmatprep.subr.mxu0 0.0
    %696 = vmatpush1.xpose.msra.mxu0 0.0
    %697 = vmatprep.subr.mxu0 0.0
    %698 = vmatpush1.xpose.msra.mxu0 0.0
    %699 = vmatprep.subr.mxu0 0.0
    %700 = vmatpush1.xpose.msra.mxu0 0.0
    %701 = vmatprep.subr.mxu0 0.0
    %702 = vmatpush1.xpose.msra.mxu0 0.0
    %703 = vmatprep.subr.mxu0 0.0
    %704 = vmatpush1.xpose.msra.mxu0 0.0
    %705 = vmatprep.subr.mxu0 0.0
    %706 = vmatpush1.xpose.msra.mxu0 0.0
    %707 = vmatprep.subr.mxu0 0.0
    %708 = vmatpush1.xpose.msra.mxu0 0.0
    %709 = vmatprep.subr.mxu0 0.0
    %710 = vmatpush1.xpose.msra.mxu0 0.0
    %711 = vmatprep.subr.mxu0 0.0
    %712 = vmatpush1.xpose.msra.mxu0 0.0
    %713 = vmatprep.subr.mxu0 0.0
    %714 = vmatpush1.xpose.msra.mxu0 0.0
    %715 = vmatprep.subr.mxu0 0.0
    %716 = vmatpush1.xpose.msra.mxu0 %v683
    %717 = vmatprep.subr.mxu0 0.0
    %718 = vmatpush2.xpose.msra.mxu0 0.0
    %719 = vmatprep.subr.mxu0 0.0
    %720 = vmatpush2.xpose.msra.mxu0 0.0
    %721 = vmatprep.subr.mxu0 0.0
    %722 = vmatpush2.xpose.msra.mxu0 0.0
    %723 = vmatprep.subr.mxu0 0.0
    %724 = vmatpush2.xpose.msra.mxu0 0.0
    %725 = vmatprep.subr.mxu0 0.0
    %726 = vmatpush2.xpose.msra.mxu0 0.0
    %727 = vmatprep.subr.mxu0 0.0
    %728 = vmatpush2.xpose.msra.mxu0 0.0
    %729 = vmatprep.subr.mxu0 0.0
    %730 = vmatpush2.xpose.msra.mxu0 0.0
    %731 = vmatprep.subr.mxu0 0.0
    %732 = vmatpush2.xpose.msra.mxu0 0.0
    %733 = vmatprep.subr.mxu0 0.0
    %734 = vmatpush2.xpose.msra.mxu0 0.0
    %735 = vmatprep.subr.mxu0 0.0
    %736 = vmatpush2.xpose.msra.mxu0 0.0
    %737 = vmatprep.subr.mxu0 0.0
    %738 = vmatpush2.xpose.msra.mxu0 0.0
    %739 = vmatprep.subr.mxu0 0.0
    %740 = vmatpush2.xpose.msra.mxu0 0.0
    %741 = vmatprep.subr.mxu0 0.0
    %742 = vmatpush2.xpose.msra.mxu0 0.0
    %743 = vmatprep.subr.mxu0 0.0
    %744 = vmatpush2.xpose.msra.mxu0 0.0
    %745 = vmatprep.subr.mxu0 0.0
    %746 = vmatpush2.xpose.msra.mxu0 0.0
    %747 = vmatprep.subr.mxu0 0.0
    %748 = vmatpush2.xpose.msra.mxu0 0.0
    %749 = vmatprep.mubr.f32.mxu0 0.0
    %750 = vmatmul.mubr.f32.gmra.mxu0 %v681
    %v751 = vpop.f32.mrf.mxu0
    %v752 = vadd.f32 0.0, %v751
    %v753 = vpop.f32.mrf.mxu0
    %754 = vdwg.mxu0
    %v755 = vsel %vm148, %v220, -inf
    %756 = vmax.xlane.f32.xlu0 %v755
    %v757 = vpop.xlane.xlu0 %756
    %v758 = vsel %vm148, %v296, -inf
    %759 = vmax.xlane.f32.xlu0 %v758
    %v760 = vpop.xlane.xlu0 %759
    %v761 = vsel %vm148, %v372, -inf
    %762 = vmax.xlane.f32.xlu0 %v761
    %v763 = vpop.xlane.xlu0 %762
    %v764 = vsel %vm148, %v448, -inf
    %765 = vmax.xlane.f32.xlu0 %v764
    %v766 = vpop.xlane.xlu0 %765
    %v767 = vsel %vm148, %v524, -inf
    %768 = vmax.xlane.f32.xlu0 %v767
    %v769 = vpop.xlane.xlu0 %768
    %v770 = vsel %vm148, %v600, -inf
    %771 = vmax.xlane.f32.xlu0 %v770
    %v772 = vpop.xlane.xlu0 %771
    %v773 = vsel %vm148, %v676, -inf
    %774 = vmax.xlane.f32.xlu0 %v773
    %v775 = vpop.xlane.xlu0 %774
    %v776 = vsel %vm148, %v752, -inf
    %777 = vmax.xlane.f32.xlu0 %v776
    %v778 = vpop.xlane.xlu0 %777
    %v779 = vsub.f32 %v220, %v757
    %v780 = vsub.f32 %v296, %v760
    %v781 = vsub.f32 %v372, %v763
    %v782 = vsub.f32 %v448, %v766
    %v783 = vsub.f32 %v524, %v769
    %v784 = vsub.f32 %v600, %v772
    %v785 = vsub.f32 %v676, %v775
    %v786 = vsub.f32 %v752, %v778
    %v787 = vmul.f32 %v779, 1.442695
    %v788 = vpow.pop %v787
    %v789 = vmul.f32 %v780, 1.442695
    %v790 = vpow.pop %v789
    %v791 = vmul.f32 %v781, 1.442695
    %v792 = vpow.pop %v791
    %v793 = vmul.f32 %v782, 1.442695
    %v794 = vpow.pop %v793
    %v795 = vmul.f32 %v783, 1.442695
    %v796 = vpow.pop %v795
    %v797 = vmul.f32 %v784, 1.442695
    %v798 = vpow.pop %v797
    %v799 = vmul.f32 %v785, 1.442695
    %v800 = vpow.pop %v799
    %v801 = vmul.f32 %v786, 1.442695
    %v802 = vpow.pop %v801
    %v803 = vsel %vm148, %v788, 0.0
    %804 = vadd.xlane.f32.xlu0 %v803
    %v805 = vpop.xlane.xlu0 %804
    %v806 = vsel %vm148, %v790, 0.0
    %807 = vadd.xlane.f32.xlu0 %v806
    %v808 = vpop.xlane.xlu0 %807
    %v809 = vsel %vm148, %v792, 0.0
    %810 = vadd.xlane.f32.xlu0 %v809
    %v811 = vpop.xlane.xlu0 %810
    %v812 = vsel %vm148, %v794, 0.0
    %813 = vadd.xlane.f32.xlu0 %v812
    %v814 = vpop.xlane.xlu0 %813
    %v815 = vsel %vm148, %v796, 0.0
    %816 = vadd.xlane.f32.xlu0 %v815
    %v817 = vpop.xlane.xlu0 %816
    %v818 = vsel %vm148, %v798, 0.0
    %819 = vadd.xlane.f32.xlu0 %v818
    %v820 = vpop.xlane.xlu0 %819
    %v821 = vsel %vm148, %v800, 0.0
    %822 = vadd.xlane.f32.xlu0 %v821
    %v823 = vpop.xlane.xlu0 %822
    %v824 = vsel %vm148, %v802, 0.0
    %825 = vadd.xlane.f32.xlu0 %v824
    %v826 = vpop.xlane.xlu0 %825
    %v827 = vrcp.pop %v805
    %v828 = vrcp.pop %v808
    %v829 = vrcp.pop %v811
    %v830 = vrcp.pop %v814
    %v831 = vrcp.pop %v817
    %v832 = vrcp.pop %v820
    %v833 = vrcp.pop %v823
    %v834 = vrcp.pop %v826
    %v835 = vmul.f32 %v805, %v827
    %v836 = vmul.f32 %v808, %v828
    %v837 = vmul.f32 %v811, %v829
    %v838 = vmul.f32 %v814, %v830
    %v839 = vmul.f32 %v817, %v831
    %v840 = vmul.f32 %v820, %v832
    %v841 = vmul.f32 %v823, %v833
    %v842 = vmul.f32 %v826, %v834
    %v843 = vsub.f32 2.0, %v835
    %v844 = vsub.f32 2.0, %v836
    %v845 = vsub.f32 2.0, %v837
    %v846 = vsub.f32 2.0, %v838
    %v847 = vsub.f32 2.0, %v839
    %v848 = vsub.f32 2.0, %v840
    %v849 = vsub.f32 2.0, %v841
    %v850 = vsub.f32 2.0, %v842
    %v851 = vmul.f32 %v827, %v843
    %v852 = vmul.f32 %v828, %v844
    %v853 = vmul.f32 %v829, %v845
    %v854 = vmul.f32 %v830, %v846
    %v855 = vmul.f32 %v831, %v847
    %v856 = vmul.f32 %v832, %v848
    %v857 = vmul.f32 %v833, %v849
    %v858 = vmul.f32 %v834, %v850
    %v859 = vmul.f32 %v788, %v851
    %v860 = vmul.f32 %v790, %v852
    %v861 = vmul.f32 %v792, %v853
    %v862 = vmul.f32 %v794, %v854
    %v863 = vmul.f32 %v796, %v855
    %v864 = vmul.f32 %v798, %v856
    %v865 = vmul.f32 %v800, %v857
    %v866 = vmul.f32 %v802, %v858
    %867 = vrot.lane.b32.xlu0 %v124, 64
    %v868 = vpop.permute.xlu0 %867
    %v871 = vsel %vm148, %v859, 0
    %873 = vmatprep.subr.mxu0 0.0
    %874 = vmatpush1.msra.mxu0 0.0
    %875 = vmatprep.subr.mxu0 0.0
    %876 = vmatpush1.msra.mxu0 0.0
    %877 = vmatprep.subr.mxu0 0.0
    %878 = vmatpush1.msra.mxu0 0.0
    %879 = vmatprep.subr.mxu0 0.0
    %880 = vmatpush1.msra.mxu0 0.0
    %881 = vmatprep.subr.mxu0 0.0
    %882 = vmatpush1.msra.mxu0 0.0
    %883 = vmatprep.subr.mxu0 0.0
    %884 = vmatpush1.msra.mxu0 0.0
    %885 = vmatprep.subr.mxu0 0.0
    %886 = vmatpush1.msra.mxu0 0.0
    %887 = vmatprep.subr.mxu0 0.0
    %888 = vmatpush1.msra.mxu0 0.0
    %889 = vmatprep.subr.mxu0 0.0
    %890 = vmatpush1.msra.mxu0 0.0
    %891 = vmatprep.subr.mxu0 0.0
    %892 = vmatpush1.msra.mxu0 0.0
    %893 = vmatprep.subr.mxu0 0.0
    %894 = vmatpush1.msra.mxu0 0.0
    %895 = vmatprep.subr.mxu0 0.0
    %896 = vmatpush1.msra.mxu0 0.0
    %897 = vmatprep.subr.mxu0 0.0
    %898 = vmatpush1.msra.mxu0 0.0
    %899 = vmatprep.subr.mxu0 0.0
    %900 = vmatpush1.msra.mxu0 0.0
    %901 = vmatprep.subr.mxu0 0.0
    %902 = vmatpush1.msra.mxu0 0.0
    %903 = vmatprep.subr.mxu0 0.0
    %904 = vmatpush1.msra.mxu0 %v868
    %905 = vmatprep.subr.mxu0 0.0
    %906 = vmatpush2.msra.mxu0 0.0
    %907 = vmatprep.subr.mxu0 0.0
    %908 = vmatpush2.msra.mxu0 0.0
    %909 = vmatprep.subr.mxu0 0.0
    %910 = vmatpush2.msra.mxu0 0.0
    %911 = vmatprep.subr.mxu0 0.0
    %912 = vmatpush2.msra.mxu0 0.0
    %913 = vmatprep.subr.mxu0 0.0
    %914 = vmatpush2.msra.mxu0 0.0
    %915 = vmatprep.subr.mxu0 0.0
    %916 = vmatpush2.msra.mxu0 0.0
    %917 = vmatprep.subr.mxu0 0.0
    %918 = vmatpush2.msra.mxu0 0.0
    %919 = vmatprep.subr.mxu0 0.0
    %920 = vmatpush2.msra.mxu0 0.0
    %921 = vmatprep.subr.mxu0 0.0
    %922 = vmatpush2.msra.mxu0 0.0
    %923 = vmatprep.subr.mxu0 0.0
    %924 = vmatpush2.msra.mxu0 0.0
    %925 = vmatprep.subr.mxu0 0.0
    %926 = vmatpush2.msra.mxu0 0.0
    %927 = vmatprep.subr.mxu0 0.0
    %928 = vmatpush2.msra.mxu0 0.0
    %929 = vmatprep.subr.mxu0 0.0
    %930 = vmatpush2.msra.mxu0 0.0
    %931 = vmatprep.subr.mxu0 0.0
    %932 = vmatpush2.msra.mxu0 0.0
    %933 = vmatprep.subr.mxu0 0.0
    %934 = vmatpush2.msra.mxu0 0.0
    %935 = vmatprep.subr.mxu0 0.0
    %936 = vmatpush2.msra.mxu0 0.0
    %937 = vmatprep.mubr.f32.mxu0 0.0
    %938 = vmatmul.mubr.f32.gmra.mxu0 %v871
    %v939 = vpop.f32.mrf.mxu0
    %v940 = vadd.f32 0.0, %v939
    %v941 = vpop.f32.mrf.mxu0
    %942 = vdwg.mxu0
    %943 = vrot.lane.b32.xlu0 %v129, 64
    %v944 = vpop.permute.xlu0 %943
    %v947 = vsel %vm148, %v860, 0
    %949 = vmatprep.subr.mxu0 0.0
    %950 = vmatpush1.msra.mxu0 0.0
    %951 = vmatprep.subr.mxu0 0.0
    %952 = vmatpush1.msra.mxu0 0.0
    %953 = vmatprep.subr.mxu0 0.0
    %954 = vmatpush1.msra.mxu0 0.0
    %955 = vmatprep.subr.mxu0 0.0
    %956 = vmatpush1.msra.mxu0 0.0
    %957 = vmatprep.subr.mxu0 0.0
    %958 = vmatpush1.msra.mxu0 0.0
    %959 = vmatprep.subr.mxu0 0.0
    %960 = vmatpush1.msra.mxu0 0.0
    %961 = vmatprep.subr.mxu0 0.0
    %962 = vmatpush1.msra.mxu0 0.0
    %963 = vmatprep.subr.mxu0 0.0
    %964 = vmatpush1.msra.mxu0 0.0
    %965 = vmatprep.subr.mxu0 0.0
    %966 = vmatpush1.msra.mxu0 0.0
    %967 = vmatprep.subr.mxu0 0.0
    %968 = vmatpush1.msra.mxu0 0.0
    %969 = vmatprep.subr.mxu0 0.0
    %970 = vmatpush1.msra.mxu0 0.0
    %971 = vmatprep.subr.mxu0 0.0
    %972 = vmatpush1.msra.mxu0 0.0
    %973 = vmatprep.subr.mxu0 0.0
    %974 = vmatpush1.msra.mxu0 0.0
    %975 = vmatprep.subr.mxu0 0.0
    %976 = vmatpush1.msra.mxu0 0.0
    %977 = vmatprep.subr.mxu0 0.0
    %978 = vmatpush1.msra.mxu0 0.0
    %979 = vmatprep.subr.mxu0 0.0
    %980 = vmatpush1.msra.mxu0 %v944
    %981 = vmatprep.subr.mxu0 0.0
    %982 = vmatpush2.msra.mxu0 0.0
    %983 = vmatprep.subr.mxu0 0.0
    %984 = vmatpush2.msra.mxu0 0.0
    %985 = vmatprep.subr.mxu0 0.0
    %986 = vmatpush2.msra.mxu0 0.0
    %987 = vmatprep.subr.mxu0 0.0
    %988 = vmatpush2.msra.mxu0 0.0
    %989 = vmatprep.subr.mxu0 0.0
    %990 = vmatpush2.msra.mxu0 0.0
    %991 = vmatprep.subr.mxu0 0.0
    %992 = vmatpush2.msra.mxu0 0.0
    %993 = vmatprep.subr.mxu0 0.0
    %994 = vmatpush2.msra.mxu0 0.0
    %995 = vmatprep.subr.mxu0 0.0
    %996 = vmatpush2.msra.mxu0 0.0
    %997 = vmatprep.subr.mxu0 0.0
    %998 = vmatpush2.msra.mxu0 0.0
    %999 = vmatprep.subr.mxu0 0.0
    %1000 = vmatpush2.msra.mxu0 0.0
    %1001 = vmatprep.subr.mxu0 0.0
    %1002 = vmatpush2.msra.mxu0 0.0
    %1003 = vmatprep.subr.mxu0 0.0
    %1004 = vmatpush2.msra.mxu0 0.0
    %1005 = vmatprep.subr.mxu0 0.0
    %1006 = vmatpush2.msra.mxu0 0.0
    %1007 = vmatprep.subr.mxu0 0.0
    %1008 = vmatpush2.msra.mxu0 0.0
    %1009 = vmatprep.subr.mxu0 0.0
    %1010 = vmatpush2.msra.mxu0 0.0
    %1011 = vmatprep.subr.mxu0 0.0
    %1012 = vmatpush2.msra.mxu0 0.0
    %1013 = vmatprep.mubr.f32.mxu0 0.0
    %1014 = vmatmul.mubr.f32.gmra.mxu0 %v947
    %v1015 = vpop.f32.mrf.mxu0
    %v1016 = vadd.f32 0.0, %v1015
    %v1017 = vpop.f32.mrf.mxu0
    %1018 = vdwg.mxu0
    %1019 = vrot.lane.b32.xlu0 %v135, 64
    %v1020 = vpop.permute.xlu0 %1019
    %v1023 = vsel %vm148, %v861, 0
    %1025 = vmatprep.subr.mxu0 0.0
    %1026 = vmatpush1.msra.mxu0 0.0
    %1027 = vmatprep.subr.mxu0 0.0
    %1028 = vmatpush1.msra.mxu0 0.0
    %1029 = vmatprep.subr.mxu0 0.0
    %1030 = vmatpush1.msra.mxu0 0.0
    %1031 = vmatprep.subr.mxu0 0.0
    %1032 = vmatpush1.msra.mxu0 0.0
    %1033 = vmatprep.subr.mxu0 0.0
    %1034 = vmatpush1.msra.mxu0 0.0
    %1035 = vmatprep.subr.mxu0 0.0
    %1036 = vmatpush1.msra.mxu0 0.0
    %1037 = vmatprep.subr.mxu0 0.0
    %1038 = vmatpush1.msra.mxu0 0.0
    %1039 = vmatprep.subr.mxu0 0.0
    %1040 = vmatpush1.msra.mxu0 0.0
    %1041 = vmatprep.subr.mxu0 0.0
    %1042 = vmatpush1.msra.mxu0 0.0
    %1043 = vmatprep.subr.mxu0 0.0
    %1044 = vmatpush1.msra.mxu0 0.0
    %1045 = vmatprep.subr.mxu0 0.0
    %1046 = vmatpush1.msra.mxu0 0.0
    %1047 = vmatprep.subr.mxu0 0.0
    %1048 = vmatpush1.msra.mxu0 0.0
    %1049 = vmatprep.subr.mxu0 0.0
    %1050 = vmatpush1.msra.mxu0 0.0
    %1051 = vmatprep.subr.mxu0 0.0
    %1052 = vmatpush1.msra.mxu0 0.0
    %1053 = vmatprep.subr.mxu0 0.0
    %1054 = vmatpush1.msra.mxu0 0.0
    %1055 = vmatprep.subr.mxu0 0.0
    %1056 = vmatpush1.msra.mxu0 %v1020
    %1057 = vmatprep.subr.mxu0 0.0
    %1058 = vmatpush2.msra.mxu0 0.0
    %1059 = vmatprep.subr.mxu0 0.0
    %1060 = vmatpush2.msra.mxu0 0.0
    %1061 = vmatprep.subr.mxu0 0.0
    %1062 = vmatpush2.msra.mxu0 0.0
    %1063 = vmatprep.subr.mxu0 0.0
    %1064 = vmatpush2.msra.mxu0 0.0
    %1065 = vmatprep.subr.mxu0 0.0
    %1066 = vmatpush2.msra.mxu0 0.0
    %1067 = vmatprep.subr.mxu0 0.0
    %1068 = vmatpush2.msra.mxu0 0.0
    %1069 = vmatprep.subr.mxu0 0.0
    %1070 = vmatpush2.msra.mxu0 0.0
    %1071 = vmatprep.subr.mxu0 0.0
    %1072 = vmatpush2.msra.mxu0 0.0
    %1073 = vmatprep.subr.mxu0 0.0
    %1074 = vmatpush2.msra.mxu0 0.0
    %1075 = vmatprep.subr.mxu0 0.0
    %1076 = vmatpush2.msra.mxu0 0.0
    %1077 = vmatprep.subr.mxu0 0.0
    %1078 = vmatpush2.msra.mxu0 0.0
    %1079 = vmatprep.subr.mxu0 0.0
    %1080 = vmatpush2.msra.mxu0 0.0
    %1081 = vmatprep.subr.mxu0 0.0
    %1082 = vmatpush2.msra.mxu0 0.0
    %1083 = vmatprep.subr.mxu0 0.0
    %1084 = vmatpush2.msra.mxu0 0.0
    %1085 = vmatprep.subr.mxu0 0.0
    %1086 = vmatpush2.msra.mxu0 0.0
    %1087 = vmatprep.subr.mxu0 0.0
    %1088 = vmatpush2.msra.mxu0 0.0
    %1089 = vmatprep.mubr.f32.mxu0 0.0
    %1090 = vmatmul.mubr.f32.gmra.mxu0 %v1023
    %v1091 = vpop.f32.mrf.mxu0
    %v1092 = vadd.f32 0.0, %v1091
    %v1093 = vpop.f32.mrf.mxu0
    %1094 = vdwg.mxu0
    %1095 = vrot.lane.b32.xlu0 %v137, 64
    %v1096 = vpop.permute.xlu0 %1095
    %v1099 = vsel %vm148, %v862, 0
    %1101 = vmatprep.subr.mxu0 0.0
    %1102 = vmatpush1.msra.mxu0 0.0
    %1103 = vmatprep.subr.mxu0 0.0
    %1104 = vmatpush1.msra.mxu0 0.0
    %1105 = vmatprep.subr.mxu0 0.0
    %1106 = vmatpush1.msra.mxu0 0.0
    %1107 = vmatprep.subr.mxu0 0.0
    %1108 = vmatpush1.msra.mxu0 0.0
    %1109 = vmatprep.subr.mxu0 0.0
    %1110 = vmatpush1.msra.mxu0 0.0
    %1111 = vmatprep.subr.mxu0 0.0
    %1112 = vmatpush1.msra.mxu0 0.0
    %1113 = vmatprep.subr.mxu0 0.0
    %1114 = vmatpush1.msra.mxu0 0.0
    %1115 = vmatprep.subr.mxu0 0.0
    %1116 = vmatpush1.msra.mxu0 0.0
    %1117 = vmatprep.subr.mxu0 0.0
    %1118 = vmatpush1.msra.mxu0 0.0
    %1119 = vmatprep.subr.mxu0 0.0
    %1120 = vmatpush1.msra.mxu0 0.0
    %1121 = vmatprep.subr.mxu0 0.0
    %1122 = vmatpush1.msra.mxu0 0.0
    %1123 = vmatprep.subr.mxu0 0.0
    %1124 = vmatpush1.msra.mxu0 0.0
    %1125 = vmatprep.subr.mxu0 0.0
    %1126 = vmatpush1.msra.mxu0 0.0
    %1127 = vmatprep.subr.mxu0 0.0
    %1128 = vmatpush1.msra.mxu0 0.0
    %1129 = vmatprep.subr.mxu0 0.0
    %1130 = vmatpush1.msra.mxu0 0.0
    %1131 = vmatprep.subr.mxu0 0.0
    %1132 = vmatpush1.msra.mxu0 %v1096
    %1133 = vmatprep.subr.mxu0 0.0
    %1134 = vmatpush2.msra.mxu0 0.0
    %1135 = vmatprep.subr.mxu0 0.0
    %1136 = vmatpush2.msra.mxu0 0.0
    %1137 = vmatprep.subr.mxu0 0.0
    %1138 = vmatpush2.msra.mxu0 0.0
    %1139 = vmatprep.subr.mxu0 0.0
    %1140 = vmatpush2.msra.mxu0 0.0
    %1141 = vmatprep.subr.mxu0 0.0
    %1142 = vmatpush2.msra.mxu0 0.0
    %1143 = vmatprep.subr.mxu0 0.0
    %1144 = vmatpush2.msra.mxu0 0.0
    %1145 = vmatprep.subr.mxu0 0.0
    %1146 = vmatpush2.msra.mxu0 0.0
    %1147 = vmatprep.subr.mxu0 0.0
    %1148 = vmatpush2.msra.mxu0 0.0
    %1149 = vmatprep.subr.mxu0 0.0
    %1150 = vmatpush2.msra.mxu0 0.0
    %1151 = vmatprep.subr.mxu0 0.0
    %1152 = vmatpush2.msra.mxu0 0.0
    %1153 = vmatprep.subr.mxu0 0.0
    %1154 = vmatpush2.msra.mxu0 0.0
    %1155 = vmatprep.subr.mxu0 0.0
    %1156 = vmatpush2.msra.mxu0 0.0
    %1157 = vmatprep.subr.mxu0 0.0
    %1158 = vmatpush2.msra.mxu0 0.0
    %1159 = vmatprep.subr.mxu0 0.0
    %1160 = vmatpush2.msra.mxu0 0.0
    %1161 = vmatprep.subr.mxu0 0.0
    %1162 = vmatpush2.msra.mxu0 0.0
    %1163 = vmatprep.subr.mxu0 0.0
    %1164 = vmatpush2.msra.mxu0 0.0
    %1165 = vmatprep.mubr.f32.mxu0 0.0
    %1166 = vmatmul.mubr.f32.gmra.mxu0 %v1099
    %v1167 = vpop.f32.mrf.mxu0
    %v1168 = vadd.f32 0.0, %v1167
    %v1169 = vpop.f32.mrf.mxu0
    %1170 = vdwg.mxu0
    %1171 = vrot.lane.b32.xlu0 %v139, 64
    %v1172 = vpop.permute.xlu0 %1171
    %v1175 = vsel %vm148, %v863, 0
    %1177 = vmatprep.subr.mxu0 0.0
    %1178 = vmatpush1.msra.mxu0 0.0
    %1179 = vmatprep.subr.mxu0 0.0
    %1180 = vmatpush1.msra.mxu0 0.0
    %1181 = vmatprep.subr.mxu0 0.0
    %1182 = vmatpush1.msra.mxu0 0.0
    %1183 = vmatprep.subr.mxu0 0.0
    %1184 = vmatpush1.msra.mxu0 0.0
    %1185 = vmatprep.subr.mxu0 0.0
    %1186 = vmatpush1.msra.mxu0 0.0
    %1187 = vmatprep.subr.mxu0 0.0
    %1188 = vmatpush1.msra.mxu0 0.0
    %1189 = vmatprep.subr.mxu0 0.0
    %1190 = vmatpush1.msra.mxu0 0.0
    %1191 = vmatprep.subr.mxu0 0.0
    %1192 = vmatpush1.msra.mxu0 0.0
    %1193 = vmatprep.subr.mxu0 0.0
    %1194 = vmatpush1.msra.mxu0 0.0
    %1195 = vmatprep.subr.mxu0 0.0
    %1196 = vmatpush1.msra.mxu0 0.0
    %1197 = vmatprep.subr.mxu0 0.0
    %1198 = vmatpush1.msra.mxu0 0.0
    %1199 = vmatprep.subr.mxu0 0.0
    %1200 = vmatpush1.msra.mxu0 0.0
    %1201 = vmatprep.subr.mxu0 0.0
    %1202 = vmatpush1.msra.mxu0 0.0
    %1203 = vmatprep.subr.mxu0 0.0
    %1204 = vmatpush1.msra.mxu0 0.0
    %1205 = vmatprep.subr.mxu0 0.0
    %1206 = vmatpush1.msra.mxu0 0.0
    %1207 = vmatprep.subr.mxu0 0.0
    %1208 = vmatpush1.msra.mxu0 %v1172
    %1209 = vmatprep.subr.mxu0 0.0
    %1210 = vmatpush2.msra.mxu0 0.0
    %1211 = vmatprep.subr.mxu0 0.0
    %1212 = vmatpush2.msra.mxu0 0.0
    %1213 = vmatprep.subr.mxu0 0.0
    %1214 = vmatpush2.msra.mxu0 0.0
    %1215 = vmatprep.subr.mxu0 0.0
    %1216 = vmatpush2.msra.mxu0 0.0
    %1217 = vmatprep.subr.mxu0 0.0
    %1218 = vmatpush2.msra.mxu0 0.0
    %1219 = vmatprep.subr.mxu0 0.0
    %1220 = vmatpush2.msra.mxu0 0.0
    %1221 = vmatprep.subr.mxu0 0.0
    %1222 = vmatpush2.msra.mxu0 0.0
    %1223 = vmatprep.subr.mxu0 0.0
    %1224 = vmatpush2.msra.mxu0 0.0
    %1225 = vmatprep.subr.mxu0 0.0
    %1226 = vmatpush2.msra.mxu0 0.0
    %1227 = vmatprep.subr.mxu0 0.0
    %1228 = vmatpush2.msra.mxu0 0.0
    %1229 = vmatprep.subr.mxu0 0.0
    %1230 = vmatpush2.msra.mxu0 0.0
    %1231 = vmatprep.subr.mxu0 0.0
    %1232 = vmatpush2.msra.mxu0 0.0
    %1233 = vmatprep.subr.mxu0 0.0
    %1234 = vmatpush2.msra.mxu0 0.0
    %1235 = vmatprep.subr.mxu0 0.0
    %1236 = vmatpush2.msra.mxu0 0.0
    %1237 = vmatprep.subr.mxu0 0.0
    %1238 = vmatpush2.msra.mxu0 0.0
    %1239 = vmatprep.subr.mxu0 0.0
    %1240 = vmatpush2.msra.mxu0 0.0
    %1241 = vmatprep.mubr.f32.mxu0 0.0
    %1242 = vmatmul.mubr.f32.gmra.mxu0 %v1175
    %v1243 = vpop.f32.mrf.mxu0
    %v1244 = vadd.f32 0.0, %v1243
    %v1245 = vpop.f32.mrf.mxu0
    %1246 = vdwg.mxu0
    %1247 = vrot.lane.b32.xlu0 %v141, 64
    %v1248 = vpop.permute.xlu0 %1247
    %v1251 = vsel %vm148, %v864, 0
    %1253 = vmatprep.subr.mxu0 0.0
    %1254 = vmatpush1.msra.mxu0 0.0
    %1255 = vmatprep.subr.mxu0 0.0
    %1256 = vmatpush1.msra.mxu0 0.0
    %1257 = vmatprep.subr.mxu0 0.0
    %1258 = vmatpush1.msra.mxu0 0.0
    %1259 = vmatprep.subr.mxu0 0.0
    %1260 = vmatpush1.msra.mxu0 0.0
    %1261 = vmatprep.subr.mxu0 0.0
    %1262 = vmatpush1.msra.mxu0 0.0
    %1263 = vmatprep.subr.mxu0 0.0
    %1264 = vmatpush1.msra.mxu0 0.0
    %1265 = vmatprep.subr.mxu0 0.0
    %1266 = vmatpush1.msra.mxu0 0.0
    %1267 = vmatprep.subr.mxu0 0.0
    %1268 = vmatpush1.msra.mxu0 0.0
    %1269 = vmatprep.subr.mxu0 0.0
    %1270 = vmatpush1.msra.mxu0 0.0
    %1271 = vmatprep.subr.mxu0 0.0
    %1272 = vmatpush1.msra.mxu0 0.0
    %1273 = vmatprep.subr.mxu0 0.0
    %1274 = vmatpush1.msra.mxu0 0.0
    %1275 = vmatprep.subr.mxu0 0.0
    %1276 = vmatpush1.msra.mxu0 0.0
    %1277 = vmatprep.subr.mxu0 0.0
    %1278 = vmatpush1.msra.mxu0 0.0
    %1279 = vmatprep.subr.mxu0 0.0
    %1280 = vmatpush1.msra.mxu0 0.0
    %1281 = vmatprep.subr.mxu0 0.0
    %1282 = vmatpush1.msra.mxu0 0.0
    %1283 = vmatprep.subr.mxu0 0.0
    %1284 = vmatpush1.msra.mxu0 %v1248
    %1285 = vmatprep.subr.mxu0 0.0
    %1286 = vmatpush2.msra.mxu0 0.0
    %1287 = vmatprep.subr.mxu0 0.0
    %1288 = vmatpush2.msra.mxu0 0.0
    %1289 = vmatprep.subr.mxu0 0.0
    %1290 = vmatpush2.msra.mxu0 0.0
    %1291 = vmatprep.subr.mxu0 0.0
    %1292 = vmatpush2.msra.mxu0 0.0
    %1293 = vmatprep.subr.mxu0 0.0
    %1294 = vmatpush2.msra.mxu0 0.0
    %1295 = vmatprep.subr.mxu0 0.0
    %1296 = vmatpush2.msra.mxu0 0.0
    %1297 = vmatprep.subr.mxu0 0.0
    %1298 = vmatpush2.msra.mxu0 0.0
    %1299 = vmatprep.subr.mxu0 0.0
    %1300 = vmatpush2.msra.mxu0 0.0
    %1301 = vmatprep.subr.mxu0 0.0
    %1302 = vmatpush2.msra.mxu0 0.0
    %1303 = vmatprep.subr.mxu0 0.0
    %1304 = vmatpush2.msra.mxu0 0.0
    %1305 = vmatprep.subr.mxu0 0.0
    %1306 = vmatpush2.msra.mxu0 0.0
    %1307 = vmatprep.subr.mxu0 0.0
    %1308 = vmatpush2.msra.mxu0 0.0
    %1309 = vmatprep.subr.mxu0 0.0
    %1310 = vmatpush2.msra.mxu0 0.0
    %1311 = vmatprep.subr.mxu0 0.0
    %1312 = vmatpush2.msra.mxu0 0.0
    %1313 = vmatprep.subr.mxu0 0.0
    %1314 = vmatpush2.msra.mxu0 0.0
    %1315 = vmatprep.subr.mxu0 0.0
    %1316 = vmatpush2.msra.mxu0 0.0
    %1317 = vmatprep.mubr.f32.mxu0 0.0
    %1318 = vmatmul.mubr.f32.gmra.mxu0 %v1251
    %v1319 = vpop.f32.mrf.mxu0
    %v1320 = vadd.f32 0.0, %v1319
    %v1321 = vpop.f32.mrf.mxu0
    %1322 = vdwg.mxu0
    %1323 = vrot.lane.b32.xlu0 %v143, 64
    %v1324 = vpop.permute.xlu0 %1323
    %v1327 = vsel %vm148, %v865, 0
    %1329 = vmatprep.subr.mxu0 0.0
    %1330 = vmatpush1.msra.mxu0 0.0
    %1331 = vmatprep.subr.mxu0 0.0
    %1332 = vmatpush1.msra.mxu0 0.0
    %1333 = vmatprep.subr.mxu0 0.0
    %1334 = vmatpush1.msra.mxu0 0.0
    %1335 = vmatprep.subr.mxu0 0.0
    %1336 = vmatpush1.msra.mxu0 0.0
    %1337 = vmatprep.subr.mxu0 0.0
    %1338 = vmatpush1.msra.mxu0 0.0
    %1339 = vmatprep.subr.mxu0 0.0
    %1340 = vmatpush1.msra.mxu0 0.0
    %1341 = vmatprep.subr.mxu0 0.0
    %1342 = vmatpush1.msra.mxu0 0.0
    %1343 = vmatprep.subr.mxu0 0.0
    %1344 = vmatpush1.msra.mxu0 0.0
    %1345 = vmatprep.subr.mxu0 0.0
    %1346 = vmatpush1.msra.mxu0 0.0
    %1347 = vmatprep.subr.mxu0 0.0
    %1348 = vmatpush1.msra.mxu0 0.0
    %1349 = vmatprep.subr.mxu0 0.0
    %1350 = vmatpush1.msra.mxu0 0.0
    %1351 = vmatprep.subr.mxu0 0.0
    %1352 = vmatpush1.msra.mxu0 0.0
    %1353 = vmatprep.subr.mxu0 0.0
    %1354 = vmatpush1.msra.mxu0 0.0
    %1355 = vmatprep.subr.mxu0 0.0
    %1356 = vmatpush1.msra.mxu0 0.0
    %1357 = vmatprep.subr.mxu0 0.0
    %1358 = vmatpush1.msra.mxu0 0.0
    %1359 = vmatprep.subr.mxu0 0.0
    %1360 = vmatpush1.msra.mxu0 %v1324
    %1361 = vmatprep.subr.mxu0 0.0
    %1362 = vmatpush2.msra.mxu0 0.0
    %1363 = vmatprep.subr.mxu0 0.0
    %1364 = vmatpush2.msra.mxu0 0.0
    %1365 = vmatprep.subr.mxu0 0.0
    %1366 = vmatpush2.msra.mxu0 0.0
    %1367 = vmatprep.subr.mxu0 0.0
    %1368 = vmatpush2.msra.mxu0 0.0
    %1369 = vmatprep.subr.mxu0 0.0
    %1370 = vmatpush2.msra.mxu0 0.0
    %1371 = vmatprep.subr.mxu0 0.0
    %1372 = vmatpush2.msra.mxu0 0.0
    %1373 = vmatprep.subr.mxu0 0.0
    %1374 = vmatpush2.msra.mxu0 0.0
    %1375 = vmatprep.subr.mxu0 0.0
    %1376 = vmatpush2.msra.mxu0 0.0
    %1377 = vmatprep.subr.mxu0 0.0
    %1378 = vmatpush2.msra.mxu0 0.0
    %1379 = vmatprep.subr.mxu0 0.0
    %1380 = vmatpush2.msra.mxu0 0.0
    %1381 = vmatprep.subr.mxu0 0.0
    %1382 = vmatpush2.msra.mxu0 0.0
    %1383 = vmatprep.subr.mxu0 0.0
    %1384 = vmatpush2.msra.mxu0 0.0
    %1385 = vmatprep.subr.mxu0 0.0
    %1386 = vmatpush2.msra.mxu0 0.0
    %1387 = vmatprep.subr.mxu0 0.0
    %1388 = vmatpush2.msra.mxu0 0.0
    %1389 = vmatprep.subr.mxu0 0.0
    %1390 = vmatpush2.msra.mxu0 0.0
    %1391 = vmatprep.subr.mxu0 0.0
    %1392 = vmatpush2.msra.mxu0 0.0
    %1393 = vmatprep.mubr.f32.mxu0 0.0
    %1394 = vmatmul.mubr.f32.gmra.mxu0 %v1327
    %v1395 = vpop.f32.mrf.mxu0
    %v1396 = vadd.f32 0.0, %v1395
    %v1397 = vpop.f32.mrf.mxu0
    %1398 = vdwg.mxu0
    %1399 = vrot.lane.b32.xlu0 %v145, 64
    %v1400 = vpop.permute.xlu0 %1399
    %v1403 = vsel %vm148, %v866, 0
    %1405 = vmatprep.subr.mxu0 0.0
    %1406 = vmatpush1.msra.mxu0 0.0
    %1407 = vmatprep.subr.mxu0 0.0
    %1408 = vmatpush1.msra.mxu0 0.0
    %1409 = vmatprep.subr.mxu0 0.0
    %1410 = vmatpush1.msra.mxu0 0.0
    %1411 = vmatprep.subr.mxu0 0.0
    %1412 = vmatpush1.msra.mxu0 0.0
    %1413 = vmatprep.subr.mxu0 0.0
    %1414 = vmatpush1.msra.mxu0 0.0
    %1415 = vmatprep.subr.mxu0 0.0
    %1416 = vmatpush1.msra.mxu0 0.0
    %1417 = vmatprep.subr.mxu0 0.0
    %1418 = vmatpush1.msra.mxu0 0.0
    %1419 = vmatprep.subr.mxu0 0.0
    %1420 = vmatpush1.msra.mxu0 0.0
    %1421 = vmatprep.subr.mxu0 0.0
    %1422 = vmatpush1.msra.mxu0 0.0
    %1423 = vmatprep.subr.mxu0 0.0
    %1424 = vmatpush1.msra.mxu0 0.0
    %1425 = vmatprep.subr.mxu0 0.0
    %1426 = vmatpush1.msra.mxu0 0.0
    %1427 = vmatprep.subr.mxu0 0.0
    %1428 = vmatpush1.msra.mxu0 0.0
    %1429 = vmatprep.subr.mxu0 0.0
    %1430 = vmatpush1.msra.mxu0 0.0
    %1431 = vmatprep.subr.mxu0 0.0
    %1432 = vmatpush1.msra.mxu0 0.0
    %1433 = vmatprep.subr.mxu0 0.0
    %1434 = vmatpush1.msra.mxu0 0.0
    %1435 = vmatprep.subr.mxu0 0.0
    %1436 = vmatpush1.msra.mxu0 %v1400
    %1437 = vmatprep.subr.mxu0 0.0
    %1438 = vmatpush2.msra.mxu0 0.0
    %1439 = vmatprep.subr.mxu0 0.0
    %1440 = vmatpush2.msra.mxu0 0.0
    %1441 = vmatprep.subr.mxu0 0.0
    %1442 = vmatpush2.msra.mxu0 0.0
    %1443 = vmatprep.subr.mxu0 0.0
    %1444 = vmatpush2.msra.mxu0 0.0
    %1445 = vmatprep.subr.mxu0 0.0
    %1446 = vmatpush2.msra.mxu0 0.0
    %1447 = vmatprep.subr.mxu0 0.0
    %1448 = vmatpush2.msra.mxu0 0.0
    %1449 = vmatprep.subr.mxu0 0.0
    %1450 = vmatpush2.msra.mxu0 0.0
    %1451 = vmatprep.subr.mxu0 0.0
    %1452 = vmatpush2.msra.mxu0 0.0
    %1453 = vmatprep.subr.mxu0 0.0
    %1454 = vmatpush2.msra.mxu0 0.0
    %1455 = vmatprep.subr.mxu0 0.0
    %1456 = vmatpush2.msra.mxu0 0.0
    %1457 = vmatprep.subr.mxu0 0.0
    %1458 = vmatpush2.msra.mxu0 0.0
    %1459 = vmatprep.subr.mxu0 0.0
    %1460 = vmatpush2.msra.mxu0 0.0
    %1461 = vmatprep.subr.mxu0 0.0
    %1462 = vmatpush2.msra.mxu0 0.0
    %1463 = vmatprep.subr.mxu0 0.0
    %1464 = vmatpush2.msra.mxu0 0.0
    %1465 = vmatprep.subr.mxu0 0.0
    %1466 = vmatpush2.msra.mxu0 0.0
    %1467 = vmatprep.subr.mxu0 0.0
    %1468 = vmatpush2.msra.mxu0 0.0
    %1469 = vmatprep.mubr.f32.mxu0 0.0
    %1470 = vmatmul.mubr.f32.gmra.mxu0 %v1403
    %v1471 = vpop.f32.mrf.mxu0
    %v1472 = vadd.f32 0.0, %v1471
    %v1473 = vpop.f32.mrf.mxu0
    %1474 = vdwg.mxu0
    %1477 = vrot.lane.b32.xlu0 %v1092, 8
    %v1478 = vpop.permute.xlu0 %1477
    %1479 = vrot.lane.b32.xlu0 %v1168, 8
    %v1480 = vpop.permute.xlu0 %1479
    %1485 = vrot.lane.b32.xlu0 %v1244, 16
    %v1486 = vpop.permute.xlu0 %1485
    %1487 = vrot.lane.b32.xlu0 %v1320, 16
    %v1488 = vpop.permute.xlu0 %1487
    %1493 = vrot.lane.b32.xlu0 %v1396, 24
    %v1494 = vpop.permute.xlu0 %1493
    %1495 = vrot.lane.b32.xlu0 %v1472, 24
    %v1496 = vpop.permute.xlu0 %1495
    %v1499 = vsel %vm148, %v940, %v1478
    %v1500 = vsel %vm148, %v1016, %v1480
    %vm1501 = vcmask 130048
    %v1502 = vsel %vm1501, %v1499, %v1486
    %v1503 = vsel %vm1501, %v1500, %v1488
    %vm1504 = vcmask 195584
    %v1505 = vsel %vm1504, %v1502, %v1494
    %v1506 = vsel %vm1504, %v1503, %v1496
    %v1508 = vsel %vm50, %v1505, 0
    %v1511 = vsel %vm50, %v1506, 0
    %1513 = vmatprep.subr.mxu0 0.0
    %1514 = vmatpush1.msra.mxu0 0.0
    %1515 = vmatprep.subr.mxu0 0.0
    %1516 = vmatpush1.msra.mxu0 0.0
    %1517 = vmatprep.subr.mxu0 0.0
    %1518 = vmatpush1.msra.mxu0 0.0
    %1519 = vmatprep.subr.mxu0 0.0
    %1520 = vmatpush1.msra.mxu0 0.0
    %1521 = vmatprep.subr.mxu0 0.0
    %1522 = vmatpush1.msra.mxu0 0.0
    %1523 = vmatprep.subr.mxu0 0.0
    %1524 = vmatpush1.msra.mxu0 0.0
    %1525 = vmatprep.subr.mxu0 0.0
    %1526 = vmatpush1.msra.mxu0 0.0
    %1527 = vmatprep.subr.mxu0 0.0
    %1528 = vmatpush1.msra.mxu0 0.0
    %1529 = vmatprep.subr.mxu0 0.0
    %1530 = vmatpush1.msra.mxu0 0.0
    %1531 = vmatprep.subr.mxu0 0.0
    %1532 = vmatpush1.msra.mxu0 0.0
    %1533 = vmatprep.subr.mxu0 0.0
    %1534 = vmatpush1.msra.mxu0 0.0
    %1535 = vmatprep.subr.mxu0 0.0
    %1536 = vmatpush1.msra.mxu0 0.0
    %1537 = vmatprep.subr.mxu0 0.0
    %1538 = vmatpush1.msra.mxu0 %v24
    %1539 = vmatprep.subr.mxu0 0.0
    %1540 = vmatpush1.msra.mxu0 %v23
    %1541 = vmatprep.subr.mxu0 0.0
    %1542 = vmatpush1.msra.mxu0 %v22
    %1543 = vmatprep.subr.mxu0 0.0
    %1544 = vmatpush1.msra.mxu0 %v21
    %1545 = vmatprep.subr.mxu0 0.0
    %1546 = vmatpush2.msra.mxu0 0.0
    %1547 = vmatprep.subr.mxu0 0.0
    %1548 = vmatpush2.msra.mxu0 0.0
    %1549 = vmatprep.subr.mxu0 0.0
    %1550 = vmatpush2.msra.mxu0 0.0
    %1551 = vmatprep.subr.mxu0 0.0
    %1552 = vmatpush2.msra.mxu0 0.0
    %1553 = vmatprep.subr.mxu0 0.0
    %1554 = vmatpush2.msra.mxu0 0.0
    %1555 = vmatprep.subr.mxu0 0.0
    %1556 = vmatpush2.msra.mxu0 0.0
    %1557 = vmatprep.subr.mxu0 0.0
    %1558 = vmatpush2.msra.mxu0 0.0
    %1559 = vmatprep.subr.mxu0 0.0
    %1560 = vmatpush2.msra.mxu0 0.0
    %1561 = vmatprep.subr.mxu0 0.0
    %1562 = vmatpush2.msra.mxu0 0.0
    %1563 = vmatprep.subr.mxu0 0.0
    %1564 = vmatpush2.msra.mxu0 0.0
    %1565 = vmatprep.subr.mxu0 0.0
    %1566 = vmatpush2.msra.mxu0 0.0
    %1567 = vmatprep.subr.mxu0 0.0
    %1568 = vmatpush2.msra.mxu0 0.0
    %1569 = vmatprep.subr.mxu0 0.0
    %1570 = vmatpush2.msra.mxu0 0.0
    %1571 = vmatprep.subr.mxu0 0.0
    %1572 = vmatpush2.msra.mxu0 0.0
    %1573 = vmatprep.subr.mxu0 0.0
    %1574 = vmatpush2.msra.mxu0 0.0
    %1575 = vmatprep.subr.mxu0 0.0
    %1576 = vmatpush2.msra.mxu0 0.0
    %1577 = vmatprep.mubr.f32.mxu0 0.0
    %1578 = vmatmul.mubr.f32.gmra.mxu0 %v1508
    %v1579 = vpop.f32.mrf.mxu0
    %v1580 = vadd.f32 0.0, %v1579
    %v1581 = vpop.f32.mrf.mxu0
    %1582 = vmatprep.mubr.f32.mxu0 0.0
    %1583 = vmatmul.mubr.f32.gmra.mxu0 %v1511
    %v1584 = vpop.f32.mrf.mxu0
    %v1585 = vadd.f32 0.0, %v1584
    %v1586 = vpop.f32.mrf.mxu0
    %1587 = vdwg.mxu0
    %v1588 = vlaneseq
    %v1589 = vshrl.u32 %v1588, 7
    %v1590 = vsub.s32 2, %v1589
    %v1591 = vrot.slane %v45, %v1590
    %v1592 = vadd.f32 %v1580, %v1591
    %v1593 = vadd.f32 %v1585, %v1591
    %v1594 = vadd.f32 %v1592, %v15
    %v1595 = vadd.f32 %v1593, %v16
    %v1596 = vsel %vm50, %v1594, 0.0
    %1597 = vadd.xlane.f32.xlu0 %v1596
    %v1598 = vpop.xlane.xlu0 %1597
    %v1599 = vsel %vm50, %v1595, 0.0
    %1600 = vadd.xlane.f32.xlu0 %v1599
    %v1601 = vpop.xlane.xlu0 %1600
    %v1602 = vrcp.pop 32.0
    %v1603 = vmul.f32 %v1598, %v1602
    %v1604 = vmul.f32 %v1601, %v1602
    %v1605 = vsub.f32 %v1594, %v1603
    %v1606 = vsub.f32 %v1595, %v1604
    %v1607 = vmul.f32 %v1605, %v1605
    %v1608 = vmul.f32 %v1606, %v1606
    %v1609 = vsel %vm50, %v1607, 0.0
    %1610 = vadd.xlane.f32.xlu0 %v1609
    %v1611 = vpop.xlane.xlu0 %1610
    %v1612 = vsel %vm50, %v1608, 0.0
    %1613 = vadd.xlane.f32.xlu0 %v1612
    %v1614 = vpop.xlane.xlu0 %1613
    %v1615 = vmul.f32 %v1611, %v1602
    %v1616 = vmul.f32 %v1614, %v1602
    %v1617 = vadd.f32 %v1615, 1e-05
    %v1618 = vadd.f32 %v1616, 1e-05
    %v1619 = vrsqrt.pop %v1617
    %v1620 = vrsqrt.pop %v1618
    %v1621 = vmul.f32 %v1605, %v1619
    %v1622 = vmul.f32 %v1606, %v1620
    %v1623 = vlaneseq
    %v1624 = vshrl.u32 %v1623, 7
    %v1625 = vsub.s32 3, %v1624
    %v1626 = vrot.slane %v45, %v1625
    %v1627 = vmul.f32 %v1621, %v1626
    %v1628 = vmul.f32 %v1622, %v1626
    %v1629 = vlaneseq
    %v1630 = vshrl.u32 %v1629, 7
    %v1631 = vsub.s32 4, %v1630
    %v1632 = vrot.slane %v45, %v1631
    %v1633 = vadd.f32 %v1627, %v1632
    %v1634 = vadd.f32 %v1628, %v1632
    %v1635 = vlaneseq
    %v1636 = vshrl.u32 %v1635, 7
    %v1637 = vsub.s32 1, %v1636
    %v1638 = vrot.slane %v45, %v1637
    %v1640 = vsel %vm50, %v1633, 0
    %v1643 = vsel %vm50, %v1634, 0
    %1645 = vmatprep.subr.mxu0 0.0
    %1646 = vmatpush1.msra.mxu0 0.0
    %1647 = vmatprep.subr.mxu0 0.0
    %1648 = vmatpush1.msra.mxu0 0.0
    %1649 = vmatprep.subr.mxu0 0.0
    %1650 = vmatpush1.msra.mxu0 0.0
    %1651 = vmatprep.subr.mxu0 0.0
    %1652 = vmatpush1.msra.mxu0 0.0
    %1653 = vmatprep.subr.mxu0 0.0
    %1654 = vmatpush1.msra.mxu0 0.0
    %1655 = vmatprep.subr.mxu0 0.0
    %1656 = vmatpush1.msra.mxu0 0.0
    %1657 = vmatprep.subr.mxu0 0.0
    %1658 = vmatpush1.msra.mxu0 0.0
    %1659 = vmatprep.subr.mxu0 0.0
    %1660 = vmatpush1.msra.mxu0 0.0
    %1661 = vmatprep.subr.mxu0 0.0
    %1662 = vmatpush1.msra.mxu0 0.0
    %1663 = vmatprep.subr.mxu0 0.0
    %1664 = vmatpush1.msra.mxu0 0.0
    %1665 = vmatprep.subr.mxu0 0.0
    %1666 = vmatpush1.msra.mxu0 0.0
    %1667 = vmatprep.subr.mxu0 0.0
    %1668 = vmatpush1.msra.mxu0 0.0
    %1669 = vmatprep.subr.mxu0 0.0
    %1670 = vmatpush1.msra.mxu0 %v28
    %1671 = vmatprep.subr.mxu0 0.0
    %1672 = vmatpush1.msra.mxu0 %v27
    %1673 = vmatprep.subr.mxu0 0.0
    %1674 = vmatpush1.msra.mxu0 %v26
    %1675 = vmatprep.subr.mxu0 0.0
    %1676 = vmatpush1.msra.mxu0 %v25
    %1677 = vmatprep.subr.mxu0 0.0
    %1678 = vmatpush2.msra.mxu0 0.0
    %1679 = vmatprep.subr.mxu0 0.0
    %1680 = vmatpush2.msra.mxu0 0.0
    %1681 = vmatprep.subr.mxu0 0.0
    %1682 = vmatpush2.msra.mxu0 0.0
    %1683 = vmatprep.subr.mxu0 0.0
    %1684 = vmatpush2.msra.mxu0 0.0
    %1685 = vmatprep.subr.mxu0 0.0
    %1686 = vmatpush2.msra.mxu0 0.0
    %1687 = vmatprep.subr.mxu0 0.0
    %1688 = vmatpush2.msra.mxu0 0.0
    %1689 = vmatprep.subr.mxu0 0.0
    %1690 = vmatpush2.msra.mxu0 0.0
    %1691 = vmatprep.subr.mxu0 0.0
    %1692 = vmatpush2.msra.mxu0 0.0
    %1693 = vmatprep.subr.mxu0 0.0
    %1694 = vmatpush2.msra.mxu0 0.0
    %1695 = vmatprep.subr.mxu0 0.0
    %1696 = vmatpush2.msra.mxu0 0.0
    %1697 = vmatprep.subr.mxu0 0.0
    %1698 = vmatpush2.msra.mxu0 0.0
    %1699 = vmatprep.subr.mxu0 0.0
    %1700 = vmatpush2.msra.mxu0 0.0
    %1701 = vmatprep.subr.mxu0 0.0
    %1702 = vmatpush2.msra.mxu0 0.0
    %1703 = vmatprep.subr.mxu0 0.0
    %1704 = vmatpush2.msra.mxu0 0.0
    %1705 = vmatprep.subr.mxu0 0.0
    %1706 = vmatpush2.msra.mxu0 0.0
    %1707 = vmatprep.subr.mxu0 0.0
    %1708 = vmatpush2.msra.mxu0 0.0
    %1709 = vmatprep.mubr.f32.mxu0 0.0
    %1710 = vmatmul.mubr.f32.gmra.mxu0 %v1640
    %v1711 = vpop.f32.mrf.mxu0
    %v1712 = vadd.f32 %v1638, %v1711
    %v1713 = vpop.f32.mrf.mxu0
    %1714 = vmatprep.mubr.f32.mxu0 0.0
    %1715 = vmatmul.mubr.f32.gmra.mxu0 %v1643
    %v1716 = vpop.f32.mrf.mxu0
    %v1717 = vadd.f32 %v1638, %v1716
    %v1718 = vpop.f32.mrf.mxu0
    %1719 = vdwg.mxu0
    %v1720 = vmul.f32 %v1712, 0.5
    %v1721 = vmul.f32 %v1717, 0.5
    %v1722 = vmul.f32 %v1712, 0.70710677
    %v1723 = vmul.f32 %v1717, 0.70710677
    %v1724 = verf.f32.pop %v1722
    %v1725 = verf.f32.pop %v1723
    %v1726 = vadd.f32 %v1724, 1.0
    %v1727 = vadd.f32 %v1725, 1.0
    %v1728 = vmul.f32 %v1720, %v1726
    %v1729 = vmul.f32 %v1721, %v1727
    %1730 = vmatprep.subr.mxu0 0.0
    %1731 = vmatpush1.msra.mxu0 %v44
    %1732 = vmatprep.subr.mxu0 0.0
    %1733 = vmatpush1.msra.mxu0 %v43
    %1734 = vmatprep.subr.mxu0 0.0
    %1735 = vmatpush1.msra.mxu0 %v42
    %1736 = vmatprep.subr.mxu0 0.0
    %1737 = vmatpush1.msra.mxu0 %v41
    %1738 = vmatprep.subr.mxu0 0.0
    %1739 = vmatpush1.msra.mxu0 %v40
    %1740 = vmatprep.subr.mxu0 0.0
    %1741 = vmatpush1.msra.mxu0 %v39
    %1742 = vmatprep.subr.mxu0 0.0
    %1743 = vmatpush1.msra.mxu0 %v38
    %1744 = vmatprep.subr.mxu0 0.0
    %1745 = vmatpush1.msra.mxu0 %v37
    %1746 = vmatprep.subr.mxu0 0.0
    %1747 = vmatpush1.msra.mxu0 %v36
    %1748 = vmatprep.subr.mxu0 0.0
    %1749 = vmatpush1.msra.mxu0 %v35
    %1750 = vmatprep.subr.mxu0 0.0
    %1751 = vmatpush1.msra.mxu0 %v34
    %1752 = vmatprep.subr.mxu0 0.0
    %1753 = vmatpush1.msra.mxu0 %v33
    %1754 = vmatprep.subr.mxu0 0.0
    %1755 = vmatpush1.msra.mxu0 %v32
    %1756 = vmatprep.subr.mxu0 0.0
    %1757 = vmatpush1.msra.mxu0 %v31
    %1758 = vmatprep.subr.mxu0 0.0
    %1759 = vmatpush1.msra.mxu0 %v30
    %1760 = vmatprep.subr.mxu0 0.0
    %1761 = vmatpush1.msra.mxu0 %v29
    %1762 = vmatprep.subr.mxu0 0.0
    %1763 = vmatpush2.msra.mxu0 0.0
    %1764 = vmatprep.subr.mxu0 0.0
    %1765 = vmatpush2.msra.mxu0 0.0
    %1766 = vmatprep.subr.mxu0 0.0
    %1767 = vmatpush2.msra.mxu0 0.0
    %1768 = vmatprep.subr.mxu0 0.0
    %1769 = vmatpush2.msra.mxu0 0.0
    %1770 = vmatprep.subr.mxu0 0.0
    %1771 = vmatpush2.msra.mxu0 0.0
    %1772 = vmatprep.subr.mxu0 0.0
    %1773 = vmatpush2.msra.mxu0 0.0
    %1774 = vmatprep.subr.mxu0 0.0
    %1775 = vmatpush2.msra.mxu0 0.0
    %1776 = vmatprep.subr.mxu0 0.0
    %1777 = vmatpush2.msra.mxu0 0.0
    %1778 = vmatprep.subr.mxu0 0.0
    %1779 = vmatpush2.msra.mxu0 0.0
    %1780 = vmatprep.subr.mxu0 0.0
    %1781 = vmatpush2.msra.mxu0 0.0
    %1782 = vmatprep.subr.mxu0 0.0
    %1783 = vmatpush2.msra.mxu0 0.0
    %1784 = vmatprep.subr.mxu0 0.0
    %1785 = vmatpush2.msra.mxu0 0.0
    %1786 = vmatprep.subr.mxu0 0.0
    %1787 = vmatpush2.msra.mxu0 0.0
    %1788 = vmatprep.subr.mxu0 0.0
    %1789 = vmatpush2.msra.mxu0 0.0
    %1790 = vmatprep.subr.mxu0 0.0
    %1791 = vmatpush2.msra.mxu0 0.0
    %1792 = vmatprep.subr.mxu0 0.0
    %1793 = vmatpush2.msra.mxu0 0.0
    %1794 = vmatprep.mubr.f32.mxu0 0.0
    %1795 = vmatmul.mubr.f32.gmra.mxu0 %v1728
    %v1796 = vpop.f32.mrf.mxu0
    %v1797 = vadd.f32 0.0, %v1796
    %v1798 = vpop.f32.mrf.mxu0
    %1799 = vmatprep.mubr.f32.mxu0 0.0
    %1800 = vmatmul.mubr.f32.gmra.mxu0 %v1729
    %v1801 = vpop.f32.mrf.mxu0
    %v1802 = vadd.f32 0.0, %v1801
    %v1803 = vpop.f32.mrf.mxu0
    %1804 = vdwg.mxu0
    %v1805 = vlaneseq
    %v1806 = vshrl.u32 %v1805, 7
    %v1807 = vsub.s32 5, %v1806
    %v1808 = vrot.slane %v45, %v1807
    %v1809 = vadd.f32 %v1797, %v1808
    %v1810 = vadd.f32 %v1802, %v1808
    %v1811 = vadd.f32 %v1809, %v1633
    %v1812 = vadd.f32 %v1810, %v1634
    %v1813 = vsel %vm50, %v1811, 0.0
    %1814 = vadd.xlane.f32.xlu0 %v1813
    %v1815 = vpop.xlane.xlu0 %1814
    %v1816 = vsel %vm50, %v1812, 0.0
    %1817 = vadd.xlane.f32.xlu0 %v1816
    %v1818 = vpop.xlane.xlu0 %1817
    %v1819 = vmul.f32 %v1815, %v1602
    %v1820 = vmul.f32 %v1818, %v1602
    %v1821 = vsub.f32 %v1811, %v1819
    %v1822 = vsub.f32 %v1812, %v1820
    %v1823 = vmul.f32 %v1821, %v1821
    %v1824 = vmul.f32 %v1822, %v1822
    %v1825 = vsel %vm50, %v1823, 0.0
    %1826 = vadd.xlane.f32.xlu0 %v1825
    %v1827 = vpop.xlane.xlu0 %1826
    %v1828 = vsel %vm50, %v1824, 0.0
    %1829 = vadd.xlane.f32.xlu0 %v1828
    %v1830 = vpop.xlane.xlu0 %1829
    %v1831 = vmul.f32 %v1827, %v1602
    %v1832 = vmul.f32 %v1830, %v1602
    %v1833 = vadd.f32 %v1831, 1e-05
    %v1834 = vadd.f32 %v1832, 1e-05
    %v1835 = vrsqrt.pop %v1833
    %v1836 = vrsqrt.pop %v1834
    %v1837 = vmul.f32 %v1821, %v1835
    %v1838 = vmul.f32 %v1822, %v1836
    %v1839 = vlaneseq
    %v1840 = vshrl.u32 %v1839, 7
    %v1841 = vsub.s32 6, %v1840
    %v1842 = vrot.slane %v45, %v1841
    %v1843 = vmul.f32 %v1837, %v1842
    %v1844 = vmul.f32 %v1838, %v1842
    %v1845 = vlaneseq
    %v1846 = vshrl.u32 %v1845, 7
    %v1847 = vsub.s32 7, %v1846
    %v1848 = vrot.slane %v45, %v1847
    %v1849 = vadd.f32 %v1843, %v1848
    %v1850 = vadd.f32 %v1844, %v1848
    %1851 = vst.msk [vmem:[#allocation2] sm:$0xff] %vm50, %v1849
    %1852 = vst.msk [vmem:[#allocation2 + $0x8] sm:$0xff] %vm50, %v1850
    // Predicated region
    $region14: #{transformer_block.1} parent=1 // pred_check
      _
    $region15: #{transformer_block.1} parent=1 // pred_check_branch
      %1854 = sbr.rel (0) target = $region17
    $region16: #{transformer_block.1} parent=1 // pred_region
      %s1856 = ssub.s32 256, 256
      %1857 = vsyncadd [#allocation3], %s1856
      %s1858 = sshll.u32 [#allocation2], 4
      %s1859 = int_to_ptr.vmem [resolvable:$true] %s1858
      %1864 = dma.vmem_to_hbm [thread:$0]  %s1859, 256, %s3, [#allocation3], 128, 128, 8
    $region17: #{transformer_block.1} parent=1 // pred_fallthru
      _
    // Predicated region
    $region18: #{transformer_block.1} parent=1 // pred_check
      _
    $region19: #{transformer_block.1} parent=1 // pred_check_branch
      %1866 = sbr.rel (0) target = $region21
    $region20: #{transformer_block.1} parent=1 // pred_region
      %1867 = dma.done [#allocation3], 256
    $region21: #{transformer_block.1} parent=1 // pred_fallthru
      _
    %1868 = vsyncpa [#allocation3], 1

</llo_original>
